<compile_context>
chip_gen: v7x
topology: tpu7x:2x2x1
jax: 0.10.0
libtpu: 0.0.40
codegen_flags: <defaults>
</compile_context>

<pallas_src>
import functools
import math

import numpy as np
import jax
import jax.numpy as jnp
from jax.experimental import pallas as pl
from jax.experimental.pallas import tpu as pltpu


def _round_up(x, m):
    return ((x + m - 1) // m) * m


def ngcf_conv_kernel(a_ref, el_ref, er_ref, deg_ref, wm_ref, wn_ref,
                     bm_ref, bn_ref, o_ref, acc_ref, *, norm):
    """One (dst-tile i, src-tile k) step of NGCF conv.

    a_ref   : [tm, tk]    bf16  adjacency tile, A[d, s]
    el_ref  : [tk, Fin]   f32   pre-normalized src features (feat * out_norm)
    er_ref  : [tm, Fin]   f32   dst features (= feat)
    deg_ref : [tm, 1]     f32   in-degree of dst rows
    wm/wn   : [Fin, Fout] f32   msg / neighbor weights (stored transposed)
    bm/bn   : [1, Fout]   f32   biases
    o_ref   : [tm, Fout]  f32   output tile (written on last k only)
    acc_ref : [tm, Fin]   f32   VMEM accumulator for agg_el = A @ el
    """
    k = pl.program_id(1)
    nk = pl.num_programs(1)

    @pl.when(k == 0)
    def _():
        acc_ref[...] = jnp.zeros_like(acc_ref)

    # A is 0/1 so the bf16 -> f32 upcast is exact; accumulate in f32.
    a = a_ref[...].astype(jnp.float32)
    acc_ref[...] += jnp.dot(a, el_ref[...], preferred_element_type=jnp.float32)

    @pl.when(k == nk - 1)
    def _():
        agg_el = acc_ref[...]                    # [tm, Fin]  = (A @ el) rows
        er = er_ref[...]                         # [tm, Fin]
        in_deg = deg_ref[...]                    # [tm, 1]

        if norm == 'both':
            in_norm = jax.lax.rsqrt(jnp.maximum(in_deg, 1.0))
        elif norm == 'none':
            in_norm = jnp.ones_like(in_deg)
        else:
            in_norm = 1.0 / jnp.maximum(in_deg, 1.0)

        # Folded: aggregation-Wn + self-loop-Wn in a single matmul.
        lhs_n = in_norm * agg_el + er            # [tm, Fin]
        lhs_m = agg_el * er                      # [tm, Fin]
        out = jnp.dot(lhs_n, wn_ref[...], preferred_element_type=jnp.float32)
        out += in_norm * jnp.dot(lhs_m, wm_ref[...],
                                 preferred_element_type=jnp.float32)
        # per-edge biases accumulate once per incoming edge -> in_deg*(bm+bn);
        # self-loop contributes a single bn.
        out += (in_norm * in_deg) * (bm_ref[...] + bn_ref[...]) + bn_ref[...]
        o_ref[...] = out.astype(o_ref.dtype)


def ngcf_conv(adj, feat, wm_t, bm, wn_t, bn, norm='both', *, tm=128, tk=128):
    """adj: [N, N] (adj[d, s] = 1 iff edge s->d), feat: [N, Fin].

    wm_t / wn_t are the Linear weights stored transposed as [Fin, Fout];
    bm / bn are [1, Fout].
    """
    adj = adj.astype(jnp.float32)
    feat = feat.astype(jnp.float32)
    N = adj.shape[0]
    Fin = feat.shape[1]
    Fout = wm_t.shape[1]

    # Tiny O(N^2)/O(N*Fin) glue: degrees + src-side normalization, so the
    # kernel never needs the transposed adjacency.
    in_deg = jnp.sum(adj, axis=1, keepdims=True)           # [N, 1] (dst)
    out_deg = jnp.sum(adj, axis=0)[:, None]                # [N, 1] (src)
    if norm == 'both':
        el = feat * jax.lax.rsqrt(jnp.maximum(out_deg, 1.0))
    else:
        el = feat

    # Pad everything to hardware-friendly shapes: N to the tile grid,
    # feature dims to the 128-lane width (zero padding is exact).
    LANE = 128
    n_step = math.lcm(tm, tk)
    N_p = _round_up(N, n_step)
    Fin_p = _round_up(Fin, LANE)
    Fout_p = _round_up(Fout, LANE)

    adj_p = jnp.zeros((N_p, N_p), jnp.bfloat16).at[:N, :N].set(
        adj.astype(jnp.bfloat16))
    el_p = jnp.zeros((N_p, Fin_p), jnp.float32).at[:N, :Fin].set(el)
    er_p = jnp.zeros((N_p, Fin_p), jnp.float32).at[:N, :Fin].set(feat)
    deg_p = jnp.zeros((N_p, 1), jnp.float32).at[:N, :].set(in_deg)
    wm_p = jnp.zeros((Fin_p, Fout_p), jnp.float32).at[:Fin, :Fout].set(wm_t)
    wn_p = jnp.zeros((Fin_p, Fout_p), jnp.float32).at[:Fin, :Fout].set(wn_t)
    bm_p = jnp.zeros((1, Fout_p), jnp.float32).at[:, :Fout].set(bm)
    bn_p = jnp.zeros((1, Fout_p), jnp.float32).at[:, :Fout].set(bn)

    grid = (N_p // tm, N_p // tk)

    flops = 2.0 * N_p * N_p * Fin_p + 2 * (2.0 * N_p * Fin_p * Fout_p)
    bytes_accessed = (N_p * N_p * 2                     # bf16 adjacency
                      + 2 * N_p * Fin_p * 4             # el, er
                      + 2 * Fin_p * Fout_p * 4          # weights
                      + N_p * Fout_p * 4                # output
                      + N_p * 4)                        # degrees

    kernel = functools.partial(ngcf_conv_kernel, norm=norm)
    out_p = pl.pallas_call(
        kernel,
        out_shape=jax.ShapeDtypeStruct((N_p, Fout_p), jnp.float32),
        grid_spec=pltpu.PrefetchScalarGridSpec(
            num_scalar_prefetch=0,
            grid=grid,
            in_specs=[
                pl.BlockSpec((tm, tk), lambda i, k: (i, k)),          # A
                pl.BlockSpec((tk, Fin_p), lambda i, k: (k, 0)),       # el
                pl.BlockSpec((tm, Fin_p), lambda i, k: (i, 0)),       # er
                pl.BlockSpec((tm, 1), lambda i, k: (i, 0)),           # in_deg
                pl.BlockSpec((Fin_p, Fout_p), lambda i, k: (0, 0)),   # Wm
                pl.BlockSpec((Fin_p, Fout_p), lambda i, k: (0, 0)),   # Wn
                pl.BlockSpec((1, Fout_p), lambda i, k: (0, 0)),       # bm
                pl.BlockSpec((1, Fout_p), lambda i, k: (0, 0)),       # bn
            ],
            out_specs=pl.BlockSpec((tm, Fout_p), lambda i, k: (i, 0)),
            scratch_shapes=[pltpu.VMEM((tm, Fin_p), jnp.float32)],
        ),
        compiler_params=pltpu.CompilerParams(
            dimension_semantics=("parallel", "arbitrary"),
            vmem_limit_bytes=32 * 1024 * 1024,
        ),
        cost_estimate=pl.CostEstimate(
            flops=int(flops),
            transcendentals=int(N_p),
            bytes_accessed=int(bytes_accessed),
        ),
    )(adj_p, el_p, er_p, deg_p, wm_p, wn_p, bm_p, bn_p)

    return out_p[:N, :Fout]


def ngcf_ref_np(adj, feat, wm_t, bm, wn_t, bn, norm='both'):
    """Edge-list reference replicating the DGL/PyTorch forward exactly."""
    adj = np.asarray(adj, np.float32)
    feat = np.asarray(feat, np.float32)
    Wm = np.asarray(wm_t, np.float32)
    Wn = np.asarray(wn_t, np.float32)
    bm_v = np.asarray(bm, np.float32)[0]
    bn_v = np.asarray(bn, np.float32)[0]
    N = adj.shape[0]
    dsts, srcs = np.nonzero(adj)                  # adj[d, s]
    out_deg = adj.sum(axis=0)                     # per-src
    in_deg = adj.sum(axis=1)                      # per-dst

    el = feat
    if norm == 'both':
        el = feat * (np.maximum(out_deg, 1.0) ** -0.5)[:, None]
    er = feat

    e = el[srcs] * er[dsts]                       # u_mul_v
    e_trans = e @ Wm + bm_v                       # msg_weight
    u_trans = el @ Wn + bn_v                      # neighbor_weight(src)
    msg = u_trans[srcs] + e_trans                 # u_add_e

    h = np.zeros((N, Wm.shape[1]), np.float32)
    np.add.at(h, dsts, msg)                       # copy_e + sum

    if norm == 'both':
        h = h * (np.maximum(in_deg, 1.0) ** -0.5)[:, None]
    elif norm != 'none':
        h = h / np.maximum(in_deg, 1.0)[:, None]

    return h + (er @ Wn + bn_v)


if __name__ == "__main__":
    # Small but non-trivial shapes: N and feature dims deliberately not
    # multiples of 128 so the padding / multi-tile paths are exercised.
    N, IN_FEATS, OUT_FEATS = 300, 48, 72
    key = jax.random.PRNGKey(0)
    k_adj, k_feat, k_wm, k_bm, k_wn, k_bn = jax.random.split(key, 6)

    # Random sparse-ish graph as dense adjacency (edge s->d iff adj[d, s]=1).
    adj = (jax.random.uniform(k_adj, (N, N)) < 0.15).astype(jnp.float32)
    feat = jax.random.normal(k_feat, (N, IN_FEATS), dtype=jnp.float32)

    # Parameters (Xavier-uniform weights as in reset_parameters, default
    # nn.Linear bias init), stored transposed as [Fin, Fout].
    xav = math.sqrt(6.0 / (IN_FEATS + OUT_FEATS))
    bias_b = 1.0 / math.sqrt(IN_FEATS)
    wm_t = jax.random.uniform(k_wm, (IN_FEATS, OUT_FEATS), jnp.float32, -xav, xav)
    wn_t = jax.random.uniform(k_wn, (IN_FEATS, OUT_FEATS), jnp.float32, -xav, xav)
    bm = jax.random.uniform(k_bm, (1, OUT_FEATS), jnp.float32, -bias_b, bias_b)
    bn = jax.random.uniform(k_bn, (1, OUT_FEATS), jnp.float32, -bias_b, bias_b)

    out = ngcf_conv(adj, feat, wm_t, bm, wn_t, bn, norm='both')
    out = jax.block_until_ready(out)

    ref = ngcf_ref_np(adj, feat, wm_t, bm, wn_t, bn, norm='both')
    np.testing.assert_allclose(np.asarray(out), ref, rtol=2e-4, atol=2e-4)

    print("KERNEL_OK")
</pallas_src>

<mosaic_0001>
module attributes {stable_mosaic.version = 11 : i64} {
  func.func @ngcf_conv_kernel(%arg0: i32, %arg1: i32, %arg2: memref<128x128xbf16, #tpu.memory_space<vmem>>, %arg3: memref<128x128xf32, #tpu.memory_space<vmem>>, %arg4: memref<128x128xf32, #tpu.memory_space<vmem>>, %arg5: memref<128x1xf32, #tpu.memory_space<vmem>>, %arg6: memref<128x128xf32, #tpu.memory_space<vmem>>, %arg7: memref<128x128xf32, #tpu.memory_space<vmem>>, %arg8: memref<1x128xf32, #tpu.memory_space<vmem>>, %arg9: memref<1x128xf32, #tpu.memory_space<vmem>>, %arg10: memref<128x128xf32, #tpu.memory_space<vmem>>, %arg11: memref<128x128xf32, #tpu.memory_space<vmem>>) attributes {dimension_semantics = [#tpu.dimension_semantics<parallel>, #tpu.dimension_semantics<arbitrary>], iteration_bounds = array<i64: 3, 3>, scalar_prefetch = 0 : i64, scratch_operands = 1 : i64, tpu.core_type = #tpu.core_type<tc>, window_params = [{transform_indices = @transform_0, window_bounds = array<i64: 128, 128>}, {transform_indices = @transform_1, window_bounds = array<i64: 128, 128>}, {transform_indices = @transform_2, window_bounds = array<i64: 128, 128>}, {transform_indices = @transform_3, window_bounds = array<i64: 128, 1>}, {pipeline_mode = #tpu.pipeline_mode<synchronous>, transform_indices = @transform_4, window_bounds = array<i64: 128, 128>}, {pipeline_mode = #tpu.pipeline_mode<synchronous>, transform_indices = @transform_5, window_bounds = array<i64: 128, 128>}, {pipeline_mode = #tpu.pipeline_mode<synchronous>, transform_indices = @transform_6, window_bounds = array<i64: 1, 128>}, {pipeline_mode = #tpu.pipeline_mode<synchronous>, transform_indices = @transform_7, window_bounds = array<i64: 1, 128>}, {transform_indices = @transform_8, window_bounds = array<i64: 128, 128>}]} {
    %c0_i32 = arith.constant 0 : i32
    %0 = arith.cmpi eq, %arg1, %c0_i32 : i32
    %1 = arith.extui %0 : i1 to i32
    %c0_i32_0 = arith.constant 0 : i32
    %2 = arith.cmpi ne, %1, %c0_i32_0 : i32
    scf.if %2 {
      %cst_9 = arith.constant 0.000000e+00 : f32
      %13 = vector.broadcast %cst_9 : f32 to vector<128x128xf32>
      %c0_10 = arith.constant 0 : index
      %c0_11 = arith.constant 0 : index
      %14 = vector.load %arg11[%c0_10, %c0_11] : memref<128x128xf32, #tpu.memory_space<vmem>>, vector<128x128xf32>
      tpu.vector_store %arg11[%c0_10, %c0_11], %13 {strides = array<i32>} : memref<128x128xf32, #tpu.memory_space<vmem>>, vector<128x128xf32>,
    } else {
    }
    %c0 = arith.constant 0 : index
    %c0_1 = arith.constant 0 : index
    %3 = vector.load %arg2[%c0, %c0_1] : memref<128x128xbf16, #tpu.memory_space<vmem>>, vector<128x128xbf16>
    %4 = arith.extf %3 : vector<128x128xbf16> to vector<128x128xf32>
    %c0_2 = arith.constant 0 : index
    %c0_3 = arith.constant 0 : index
    %5 = vector.load %arg11[%c0_2, %c0_3] : memref<128x128xf32, #tpu.memory_space<vmem>>, vector<128x128xf32>
    %c0_4 = arith.constant 0 : index
    %c0_5 = arith.constant 0 : index
    %6 = vector.load %arg3[%c0_4, %c0_5] : memref<128x128xf32, #tpu.memory_space<vmem>>, vector<128x128xf32>
    %cst = arith.constant dense<0.000000e+00> : vector<128x128xf32>
    %7 = tpu.matmul %4, %6, %cst {dimension_numbers = #tpu.dot_dimension_numbers<[1], [0], [0], [1], [0, 0, 1, 1], [], []>} : vector<128x128xf32>, vector<128x128xf32>, vector<128x128xf32> -> vector<128x128xf32>
    %8 = arith.addf %5, %7 : vector<128x128xf32>
    %c0_6 = arith.constant 0 : index
    %c0_7 = arith.constant 0 : index
    %9 = vector.load %arg11[%c0_6, %c0_7] : memref<128x128xf32, #tpu.memory_space<vmem>>, vector<128x128xf32>
    tpu.vector_store %arg11[%c0_6, %c0_7], %8 {strides = array<i32>} : memref<128x128xf32, #tpu.memory_space<vmem>>, vector<128x128xf32>,
    %c2_i32 = arith.constant 2 : i32
    %10 = arith.cmpi eq, %arg1, %c2_i32 : i32
    %11 = arith.extui %10 : i1 to i32
    %c0_i32_8 = arith.constant 0 : i32
    %12 = arith.cmpi ne, %11, %c0_i32_8 : i32
    scf.if %12 {
      %c0_9 = arith.constant 0 : index
      %c0_10 = arith.constant 0 : index
      %13 = vector.load %arg11[%c0_9, %c0_10] : memref<128x128xf32, #tpu.memory_space<vmem>>, vector<128x128xf32>
      %c0_11 = arith.constant 0 : index
      %c0_12 = arith.constant 0 : index
      %14 = vector.load %arg4[%c0_11, %c0_12] : memref<128x128xf32, #tpu.memory_space<vmem>>, vector<128x128xf32>
      %c0_13 = arith.constant 0 : index
      %c0_14 = arith.constant 0 : index
      %15 = vector.load %arg5[%c0_13, %c0_14] : memref<128x1xf32, #tpu.memory_space<vmem>>, vector<128x1xf32>
      %cst_15 = arith.constant 1.000000e+00 : f32
      %16 = vector.broadcast %cst_15 : f32 to vector<128x1xf32>
      %17 = arith.maximumf %15, %16 : vector<128x1xf32>
      %18 = math.rsqrt %17 : vector<128x1xf32>
      %19 = vector.broadcast %18 : vector<128x1xf32> to vector<128x128xf32>
      %20 = arith.mulf %19, %13 : vector<128x128xf32>
      %21 = arith.addf %20, %14 : vector<128x128xf32>
      %22 = arith.mulf %13, %14 : vector<128x128xf32>
      %c0_16 = arith.constant 0 : index
      %c0_17 = arith.constant 0 : index
      %23 = vector.load %arg7[%c0_16, %c0_17] : memref<128x128xf32, #tpu.memory_space<vmem>>, vector<128x128xf32>
      %cst_18 = arith.constant dense<0.000000e+00> : vector<128x128xf32>
      %24 = tpu.matmul %21, %23, %cst_18 {dimension_numbers = #tpu.dot_dimension_numbers<[1], [0], [0], [1], [0, 0, 1, 1], [], []>} : vector<128x128xf32>, vector<128x128xf32>, vector<128x128xf32> -> vector<128x128xf32>
      %c0_19 = arith.constant 0 : index
      %c0_20 = arith.constant 0 : index
      %25 = vector.load %arg6[%c0_19, %c0_20] : memref<128x128xf32, #tpu.memory_space<vmem>>, vector<128x128xf32>
      %cst_21 = arith.constant dense<0.000000e+00> : vector<128x128xf32>
      %26 = tpu.matmul %22, %25, %cst_21 {dimension_numbers = #tpu.dot_dimension_numbers<[1], [0], [0], [1], [0, 0, 1, 1], [], []>} : vector<128x128xf32>, vector<128x128xf32>, vector<128x128xf32> -> vector<128x128xf32>
      %27 = vector.broadcast %18 : vector<128x1xf32> to vector<128x128xf32>
      %28 = arith.mulf %27, %26 : vector<128x128xf32>
      %29 = arith.addf %24, %28 : vector<128x128xf32>
      %30 = arith.mulf %18, %15 : vector<128x1xf32>
      %c0_22 = arith.constant 0 : index
      %c0_23 = arith.constant 0 : index
      %31 = vector.load %arg8[%c0_22, %c0_23] : memref<1x128xf32, #tpu.memory_space<vmem>>, vector<1x128xf32>
      %c0_24 = arith.constant 0 : index
      %c0_25 = arith.constant 0 : index
      %32 = vector.load %arg9[%c0_24, %c0_25] : memref<1x128xf32, #tpu.memory_space<vmem>>, vector<1x128xf32>
      %33 = arith.addf %31, %32 : vector<1x128xf32>
      %34 = vector.broadcast %30 : vector<128x1xf32> to vector<128x128xf32>
      %35 = vector.broadcast %33 : vector<1x128xf32> to vector<128x128xf32>
      %36 = arith.mulf %34, %35 : vector<128x128xf32>
      %c0_26 = arith.constant 0 : index
      %c0_27 = arith.constant 0 : index
      %37 = vector.load %arg9[%c0_26, %c0_27] : memref<1x128xf32, #tpu.memory_space<vmem>>, vector<1x128xf32>
      %38 = vector.broadcast %37 : vector<1x128xf32> to vector<128x128xf32>
      %39 = arith.addf %36, %38 : vector<128x128xf32>
      %40 = arith.addf %29, %39 : vector<128x128xf32>
      %c0_28 = arith.constant 0 : index
      %c0_29 = arith.constant 0 : index
      %41 = vector.load %arg10[%c0_28, %c0_29] : memref<128x128xf32, #tpu.memory_space<vmem>>, vector<128x128xf32>
      tpu.vector_store %arg10[%c0_28, %c0_29], %40 {strides = array<i32>} : memref<128x128xf32, #tpu.memory_space<vmem>>, vector<128x128xf32>,
    } else {
    }
    return
  }
  func.func @transform_0(%arg0: i32, %arg1: i32) -> (i32, i32) {
    %c0_i32 = arith.constant 0 : i32
    return %arg0, %arg1 : i32, i32
  }
  func.func @transform_1(%arg0: i32, %arg1: i32) -> (i32, i32) {
    %c0_i32 = arith.constant 0 : i32
    %c0_i32_0 = arith.constant 0 : i32
    return %arg1, %c0_i32 : i32, i32
  }
  func.func @transform_2(%arg0: i32, %arg1: i32) -> (i32, i32) {
    %c0_i32 = arith.constant 0 : i32
    %c0_i32_0 = arith.constant 0 : i32
    return %arg0, %c0_i32 : i32, i32
  }
  func.func @transform_3(%arg0: i32, %arg1: i32) -> (i32, i32) {
    %c0_i32 = arith.constant 0 : i32
    %c0_i32_0 = arith.constant 0 : i32
    return %arg0, %c0_i32 : i32, i32
  }
  func.func @transform_4(%arg0: i32, %arg1: i32) -> (i32, i32) {
    %c0_i32 = arith.constant 0 : i32
    %c0_i32_0 = arith.constant 0 : i32
    %c0_i32_1 = arith.constant 0 : i32
    return %c0_i32, %c0_i32_0 : i32, i32
  }
  func.func @transform_5(%arg0: i32, %arg1: i32) -> (i32, i32) {
    %c0_i32 = arith.constant 0 : i32
    %c0_i32_0 = arith.constant 0 : i32
    %c0_i32_1 = arith.constant 0 : i32
    return %c0_i32, %c0_i32_0 : i32, i32
  }
  func.func @transform_6(%arg0: i32, %arg1: i32) -> (i32, i32) {
    %c0_i32 = arith.constant 0 : i32
    %c0_i32_0 = arith.constant 0 : i32
    %c0_i32_1 = arith.constant 0 : i32
    return %c0_i32, %c0_i32_0 : i32, i32
  }
  func.func @transform_7(%arg0: i32, %arg1: i32) -> (i32, i32) {
    %c0_i32 = arith.constant 0 : i32
    %c0_i32_0 = arith.constant 0 : i32
    %c0_i32_1 = arith.constant 0 : i32
    return %c0_i32, %c0_i32_0 : i32, i32
  }
  func.func @transform_8(%arg0: i32, %arg1: i32) -> (i32, i32) {
    %c0_i32 = arith.constant 0 : i32
    %c0_i32_0 = arith.constant 0 : i32
    return %arg0, %c0_i32 : i32, i32
  }
}

</mosaic_0001>

<llo_original>
// kernel: tpu_custom_call.1
$region0: #{tpu_custom_call.1}
  #allocation0 [shape = 'u32[]', space=smem, size = 0x4, offset = 0x4, fixed_abs, tag = 'smem constant byte address 0x4 - core index']
  #allocation1 [shape = 'u32[144,128]{1,0:T(1,128)}', space=vmem, size = 0x12000, scoped, tag = 'internal scratch']
  #allocation2 [shape = 'f32[128,128]{1,0:T(8,128)}', space=vmem, size = 0x10000, scoped, tag = 'scratch operand']
  %s0 = inlined_call_operand.hbm [shape: bf16[384,384], index: 0, kind: input, shape index: {}]
  %s1 = inlined_call_operand.vmem [shape: f32[384,128], index: 1, kind: input, shape index: {}]
  %s2 = inlined_call_operand.hbm [shape: f32[384,128], index: 2, kind: input, shape index: {}]
  %s3 = inlined_call_operand.vmem [shape: f32[384,1], index: 3, kind: input, shape index: {}]
  %s4 = inlined_call_operand.hbm [shape: f32[128,128], index: 4, kind: input, shape index: {}]
  %s5 = inlined_call_operand.hbm [shape: f32[128,128], index: 5, kind: input, shape index: {}]
  %s6 = inlined_call_operand.vmem [shape: f32[1,128], index: 6, kind: input, shape index: {}]
  %s7 = inlined_call_operand.vmem [shape: f32[1,128], index: 7, kind: input, shape index: {}]
  %s8 = inlined_call_operand.hbm [shape: f32[384,128], index: 8, kind: output, shape index: {}]
  %s9 = sld [smem:[#allocation0]]
  $region89: #{tpu_custom_call.1} parent=0
    _
  %s11 = ssub.s32 1, %s9
  %s12 = scalar_select 0, %s11, %s9
  $region1: #{tpu_custom_call.1} parent=0
    #allocation3 [shape = 'u8[65536]{0}', space=vmem, size = 0x10000, scoped, tag = 'input window, operand 0']
    #allocation4 [shape = 's32[2]{0}', space=sflag, size = 0x8, scoped, tag = 'scoped memory for tpu_custom_call.1']
    #allocation5 [shape = 's32[2]{0}', space=sflag, size = 0x8, scoped, tag = 'scoped memory for tpu_custom_call.1']
    #allocation6 [shape = 'u8[131072]{0}', space=vmem, size = 0x20000, scoped, tag = 'input window, operand 2']
    #allocation7 [shape = 's32[2]{0}', space=sflag, size = 0x8, scoped, tag = 'scoped memory for tpu_custom_call.1']
    #allocation8 [shape = 'u8[65536]{0}', space=vmem, size = 0x10000, scoped, tag = 'input window, operand 4, single buffered']
    #allocation9 [shape = 'u8[65536]{0}', space=vmem, size = 0x10000, scoped, tag = 'input window, operand 5, single buffered']
    #allocation10 [shape = 's32[1]{0}', space=sflag, size = 0x4, scoped, tag = 'scoped memory for tpu_custom_call.1']
    #allocation11 [shape = 'u8[131072]{0}', space=vmem, size = 0x20000, scoped, tag = 'output window, operand 0']
    %13 = vsyncpa [#allocation4], 0
    %s14 = scalar_lea.sflag [#allocation4], 1
    %15 = vsyncpa %s14, 0
    %16 = vsyncpa [#allocation7], 0
    %s17 = scalar_lea.sflag [#allocation7], 1
    %18 = vsyncpa %s17, 0
    %19 = vsyncpa [#allocation10], 0
    %20 = vsyncpa [#allocation5], 0
    %s21 = scalar_lea.sflag [#allocation5], 1
    %22 = vsyncpa %s21, 0
    loop: start=0, step=1, limit=11
    $region2: #{tpu_custom_call.1} parent=1 // loop_pre_header
      _
    $region3: #{tpu_custom_call.1} parent=1 // loop_header
      %s24 = sphi 0, %s28
      %p25 = scmp.ge.s32.totalorder %s24, 11
      %s31 = sphi 0, %s43
      %s32 = sphi 0, %s39
      %s33 = sphi 0, %s31
      %s34 = sphi 0, %s32
      %s35 = sphi 0, %s33
      %s36 = sphi 0, %s34
      %s48 = sphi 0, %s50
      %s51 = sphi 0, %s48
      %s52 = sphi 0, %s51
      %s68 = sphi 0, %s52
      %s74 = sphi 0, %s76
      %s77 = sphi 0, %s74
      %s78 = sphi 0, %s77
      %s94 = sphi 0, %s78
      %s100 = sphi 0, %s102
      %s103 = sphi 0, %s100
      %s104 = sphi 0, %s103
      %s120 = sphi 0, %s104
      %s126 = sphi 0, %s128
      %s129 = sphi 0, %s126
      %s130 = sphi 0, %s129
      %s146 = sphi 0, %s130
      %s150 = sphi 0, %s150
      %s152 = sphi 0, %s150
      %s153 = sphi 0, %s152
      %s167 = sphi 0, %s153
      %s171 = sphi 0, %s171
      %s173 = sphi 0, %s171
      %s174 = sphi 0, %s173
      %s188 = sphi 0, %s174
      %s192 = sphi 0, %s192
      %s194 = sphi 0, %s192
      %s195 = sphi 0, %s194
      %s209 = sphi 0, %s195
      %s213 = sphi 0, %s213
      %s215 = sphi 0, %s213
      %s216 = sphi 0, %s215
      %s230 = sphi 0, %s216
      %s236 = sphi 0, %s238
      %s239 = sphi 0, %s236
      %s240 = sphi 0, %s239
      %s256 = sphi 0, %s240
    $region4: #{tpu_custom_call.1} parent=1 // loop_header_branch
      %27 = sbr.rel (%p25) target = $region8
    $region5: #{tpu_custom_call.1} parent=1 // loop_body
      %s29 = ssub.s32 %s24, 1
      %s30 = ssub.s32 %s24, 2
      %s37 = sadd.s32 1, %s32
      %p38 = scmp.ge.s32.totalorder %s37, 3
      %s39 = scalar_select %p38, 0, %s37
      %s40 = sadd.s32 1, %s31
      %s41 = scalar_select %p38, %s40, %s31
      %p42 = scmp.ge.s32.totalorder %s41, 3
      %s43 = scalar_select %p42, 0, %s41
      %s44 = ssub.s32 %s31, %s43
      %s45 = ssub.s32 %s32, %s39
      %s46 = sor.u32 %s44, %s45
      %p47 = scmp.eq.s32.totalorder %s46, 0
      %s49 = sadd.s32 %s48, 1
      %s50 = scalar_select %p47, %s48, %s49
      %p53 = pneg %p47
      %p54 = scmp.eq.s32.totalorder %s24, 8
      %p55 = por %p53, %p54
      %p56 = scmp.ne.s32.totalorder %s48, %s51
      %p57 = scmp.eq.s32.totalorder %s24, 0
      %p58 = por %p56, %p57
      %p59 = scmp.ne.s32.totalorder %s48, %s51
      %p60 = scmp.eq.s32.totalorder %s29, 8
      %p61 = por %p59, %p60
      %p62 = scmp.ne.s32.totalorder %s51, %s52
      %p63 = scmp.eq.s32.totalorder %s29, 0
      %p64 = por %p62, %p63
      %p65 = scmp.ne.s32.totalorder %s51, %s52
      %p66 = scmp.eq.s32.totalorder %s30, 8
      %p67 = por %p65, %p66
      %p69 = scmp.ne.s32.totalorder %s52, %s68
      %p70 = scmp.eq.s32.totalorder %s30, 0
      %p71 = por %p69, %p70
      %s72 = ssub.s32 %s32, %s39
      %p73 = scmp.eq.s32.totalorder %s72, 0
      %s75 = sadd.s32 %s74, 1
      %s76 = scalar_select %p73, %s74, %s75
      %p79 = pneg %p73
      %p80 = scmp.eq.s32.totalorder %s24, 8
      %p81 = por %p79, %p80
      %p82 = scmp.ne.s32.totalorder %s74, %s77
      %p83 = scmp.eq.s32.totalorder %s24, 0
      %p84 = por %p82, %p83
      %p85 = scmp.ne.s32.totalorder %s74, %s77
      %p86 = scmp.eq.s32.totalorder %s29, 8
      %p87 = por %p85, %p86
      %p88 = scmp.ne.s32.totalorder %s77, %s78
      %p89 = scmp.eq.s32.totalorder %s29, 0
      %p90 = por %p88, %p89
      %p91 = scmp.ne.s32.totalorder %s77, %s78
      %p92 = scmp.eq.s32.totalorder %s30, 8
      %p93 = por %p91, %p92
      %p95 = scmp.ne.s32.totalorder %s78, %s94
      %p96 = scmp.eq.s32.totalorder %s30, 0
      %p97 = por %p95, %p96
      %s98 = ssub.s32 %s31, %s43
      %p99 = scmp.eq.s32.totalorder %s98, 0
      %s101 = sadd.s32 %s100, 1
      %s102 = scalar_select %p99, %s100, %s101
      %p105 = pneg %p99
      %p106 = scmp.eq.s32.totalorder %s24, 8
      %p107 = por %p105, %p106
      %p108 = scmp.ne.s32.totalorder %s100, %s103
      %p109 = scmp.eq.s32.totalorder %s24, 0
      %p110 = por %p108, %p109
      %p111 = scmp.ne.s32.totalorder %s100, %s103
      %p112 = scmp.eq.s32.totalorder %s29, 8
      %p113 = por %p111, %p112
      %p114 = scmp.ne.s32.totalorder %s103, %s104
      %p115 = scmp.eq.s32.totalorder %s29, 0
      %p116 = por %p114, %p115
      %p117 = scmp.ne.s32.totalorder %s103, %s104
      %p118 = scmp.eq.s32.totalorder %s30, 8
      %p119 = por %p117, %p118
      %p121 = scmp.ne.s32.totalorder %s104, %s120
      %p122 = scmp.eq.s32.totalorder %s30, 0
      %p123 = por %p121, %p122
      %s124 = ssub.s32 %s31, %s43
      %p125 = scmp.eq.s32.totalorder %s124, 0
      %s127 = sadd.s32 %s126, 1
      %s128 = scalar_select %p125, %s126, %s127
      %p131 = pneg %p125
      %p132 = scmp.eq.s32.totalorder %s24, 8
      %p133 = por %p131, %p132
      %p134 = scmp.ne.s32.totalorder %s126, %s129
      %p135 = scmp.eq.s32.totalorder %s24, 0
      %p136 = por %p134, %p135
      %p137 = scmp.ne.s32.totalorder %s126, %s129
      %p138 = scmp.eq.s32.totalorder %s29, 8
      %p139 = por %p137, %p138
      %p140 = scmp.ne.s32.totalorder %s129, %s130
      %p141 = scmp.eq.s32.totalorder %s29, 0
      %p142 = por %p140, %p141
      %p143 = scmp.ne.s32.totalorder %s129, %s130
      %p144 = scmp.eq.s32.totalorder %s30, 8
      %p145 = por %p143, %p144
      %p147 = scmp.ne.s32.totalorder %s130, %s146
      %p148 = scmp.eq.s32.totalorder %s30, 0
      %p149 = por %p147, %p148
      %s151 = sadd.s32 %s150, 1
      %p154 = scmp.eq.s32.totalorder %s24, 8
      %p155 = scmp.ne.s32.totalorder %s150, %s152
      %p156 = scmp.eq.s32.totalorder %s24, 0
      %p157 = por %p155, %p156
      %p158 = scmp.ne.s32.totalorder %s150, %s152
      %p159 = scmp.eq.s32.totalorder %s29, 8
      %p160 = por %p158, %p159
      %p161 = scmp.ne.s32.totalorder %s152, %s153
      %p162 = scmp.eq.s32.totalorder %s29, 0
      %p163 = por %p161, %p162
      %p164 = scmp.ne.s32.totalorder %s152, %s153
      %p165 = scmp.eq.s32.totalorder %s30, 8
      %p166 = por %p164, %p165
      %p168 = scmp.ne.s32.totalorder %s153, %s167
      %p169 = scmp.eq.s32.totalorder %s30, 0
      %p170 = por %p168, %p169
      %s172 = sadd.s32 %s171, 1
      %p175 = scmp.eq.s32.totalorder %s24, 8
      %p176 = scmp.ne.s32.totalorder %s171, %s173
      %p177 = scmp.eq.s32.totalorder %s24, 0
      %p178 = por %p176, %p177
      %p179 = scmp.ne.s32.totalorder %s171, %s173
      %p180 = scmp.eq.s32.totalorder %s29, 8
      %p181 = por %p179, %p180
      %p182 = scmp.ne.s32.totalorder %s173, %s174
      %p183 = scmp.eq.s32.totalorder %s29, 0
      %p184 = por %p182, %p183
      %p185 = scmp.ne.s32.totalorder %s173, %s174
      %p186 = scmp.eq.s32.totalorder %s30, 8
      %p187 = por %p185, %p186
      %p189 = scmp.ne.s32.totalorder %s174, %s188
      %p190 = scmp.eq.s32.totalorder %s30, 0
      %p191 = por %p189, %p190
      %s193 = sadd.s32 %s192, 1
      %p196 = scmp.eq.s32.totalorder %s24, 8
      %p197 = scmp.ne.s32.totalorder %s192, %s194
      %p198 = scmp.eq.s32.totalorder %s24, 0
      %p199 = por %p197, %p198
      %p200 = scmp.ne.s32.totalorder %s192, %s194
      %p201 = scmp.eq.s32.totalorder %s29, 8
      %p202 = por %p200, %p201
      %p203 = scmp.ne.s32.totalorder %s194, %s195
      %p204 = scmp.eq.s32.totalorder %s29, 0
      %p205 = por %p203, %p204
      %p206 = scmp.ne.s32.totalorder %s194, %s195
      %p207 = scmp.eq.s32.totalorder %s30, 8
      %p208 = por %p206, %p207
      %p210 = scmp.ne.s32.totalorder %s195, %s209
      %p211 = scmp.eq.s32.totalorder %s30, 0
      %p212 = por %p210, %p211
      %s214 = sadd.s32 %s213, 1
      %p217 = scmp.eq.s32.totalorder %s24, 8
      %p218 = scmp.ne.s32.totalorder %s213, %s215
      %p219 = scmp.eq.s32.totalorder %s24, 0
      %p220 = por %p218, %p219
      %p221 = scmp.ne.s32.totalorder %s213, %s215
      %p222 = scmp.eq.s32.totalorder %s29, 8
      %p223 = por %p221, %p222
      %p224 = scmp.ne.s32.totalorder %s215, %s216
      %p225 = scmp.eq.s32.totalorder %s29, 0
      %p226 = por %p224, %p225
      %p227 = scmp.ne.s32.totalorder %s215, %s216
      %p228 = scmp.eq.s32.totalorder %s30, 8
      %p229 = por %p227, %p228
      %p231 = scmp.ne.s32.totalorder %s216, %s230
      %p232 = scmp.eq.s32.totalorder %s30, 0
      %p233 = por %p231, %p232
      %s234 = ssub.s32 %s31, %s43
      %p235 = scmp.eq.s32.totalorder %s234, 0
      %s237 = sadd.s32 %s236, 1
      %s238 = scalar_select %p235, %s236, %s237
      %p241 = pneg %p235
      %p242 = scmp.eq.s32.totalorder %s24, 8
      %p243 = por %p241, %p242
      %p244 = scmp.ne.s32.totalorder %s236, %s239
      %p245 = scmp.eq.s32.totalorder %s24, 0
      %p246 = por %p244, %p245
      %p247 = scmp.ne.s32.totalorder %s236, %s239
      %p248 = scmp.eq.s32.totalorder %s29, 8
      %p249 = por %p247, %p248
      %p250 = scmp.ne.s32.totalorder %s239, %s240
      %p251 = scmp.eq.s32.totalorder %s29, 0
      %p252 = por %p250, %p251
      %p253 = scmp.ne.s32.totalorder %s239, %s240
      %p254 = scmp.eq.s32.totalorder %s30, 8
      %p255 = por %p253, %p254
      %p257 = scmp.ne.s32.totalorder %s240, %s256
      %p258 = scmp.eq.s32.totalorder %s30, 0
      %p259 = por %p257, %p258
      %p260 = scmp.le.s32.totalorder 1, %s24
      %p261 = scmp.lt.s32.totalorder %s24, 10
      %p262 = pnand %p260, %p261
      %p263 = pneg %p262
      // Predicated region
      $region9: #{tpu_custom_call.1} parent=5 // pred_check
        _
      $region10: #{tpu_custom_call.1} parent=5 // pred_check_branch
        %265 = sbr.rel (%p262) target = $region12
      $region11: #{tpu_custom_call.1} parent=5 // pred_region
        %s266 = ssub.s32 %s24, 1
        // Predicated region
        $region13: #{tpu_custom_call.1} parent=11 // pred_check
          %p267 = pneg %p163
        $region14: #{tpu_custom_call.1} parent=11 // pred_check_branch
          %269 = sbr.rel (%p267) target = $region16
        $region15: #{tpu_custom_call.1} parent=11 // pred_region
          %s271 = ssub.s32 2048, 2048
          %272 = vsyncadd [#allocation7], %s271
          %s273 = sshll.u32 [#allocation8], 4
          %s274 = int_to_ptr.vmem [resolvable:$true] %s273
          %279 = dma.hbm_to_vmem [thread:$0]  %s4, 2048, %s274, [#allocation7], 128, 128, 8
        $region16: #{tpu_custom_call.1} parent=11 // pred_fallthru
          _
        // Predicated region
        $region17: #{tpu_custom_call.1} parent=11 // pred_check
          %p280 = pneg %p184
        $region18: #{tpu_custom_call.1} parent=11 // pred_check_branch
          %282 = sbr.rel (%p280) target = $region20
        $region19: #{tpu_custom_call.1} parent=11 // pred_region
          %s284 = ssub.s32 2048, 2048
          %285 = vsyncadd [#allocation10], %s284
          %s286 = sshll.u32 [#allocation9], 4
          %s287 = int_to_ptr.vmem [resolvable:$true] %s286
          %292 = dma.hbm_to_vmem [thread:$0]  %s5, 2048, %s287, [#allocation10], 128, 128, 8
        $region20: #{tpu_custom_call.1} parent=11 // pred_fallthru
          _
        // Predicated region
        $region21: #{tpu_custom_call.1} parent=11 // pred_check
          %p293 = pneg %p205
        $region22: #{tpu_custom_call.1} parent=11 // pred_check_branch
          %295 = sbr.rel (%p293) target = $region24
        $region23: #{tpu_custom_call.1} parent=11 // pred_region
          _
        $region24: #{tpu_custom_call.1} parent=11 // pred_fallthru
          _
        // Predicated region
        $region25: #{tpu_custom_call.1} parent=11 // pred_check
          %p296 = pneg %p226
        $region26: #{tpu_custom_call.1} parent=11 // pred_check_branch
          %298 = sbr.rel (%p296) target = $region28
        $region27: #{tpu_custom_call.1} parent=11 // pred_region
          _
        $region28: #{tpu_custom_call.1} parent=11 // pred_fallthru
          _
      $region12: #{tpu_custom_call.1} parent=5 // pred_fallthru
        _
      %p299 = scmp.lt.s32.totalorder %s24, 9
      // Predicated region
      $region29: #{tpu_custom_call.1} parent=5 // pred_check
        %p300 = pneg %p299
      $region30: #{tpu_custom_call.1} parent=5 // pred_check_branch
        %302 = sbr.rel (%p300) target = $region32
      $region31: #{tpu_custom_call.1} parent=5 // pred_region
        // Predicated region
        $region33: #{tpu_custom_call.1} parent=31 // pred_check
          %p303 = pneg %p58
        $region34: #{tpu_custom_call.1} parent=31 // pred_check_branch
          %305 = sbr.rel (%p303) target = $region36
        $region35: #{tpu_custom_call.1} parent=31 // pred_region
          %s306 = sand.u32 %s48, 1
          %s307 = scalar_lea.sflag [#allocation4], %s306
          %s308 = sand.u32 %s48, 1
          %s309 = smul.addr %s308, 64
          %s310 = scalar_lea.vmem [#allocation3], %s309
          %s311 = smul.u32 16, %s31
          %s313 = ssub.s32 1024, 1024
          %314 = vsyncadd %s307, %s313
          %s315 = smul.addr %s311, 3
          %s316 = sadd.s32 %s32, %s315
          %s317 = smul.addr %s316, 64
          %s318 = scalar_lea.hbm %s0, %s317
          %s319 = sshll.u32 %s310, 4
          %s320 = int_to_ptr.vmem [resolvable:$true] %s319
          %325 = dma.hbm_to_vmem [thread:$0]  %s318, 1024, %s320, %s307, 192, 64, 4
        $region36: #{tpu_custom_call.1} parent=31 // pred_fallthru
          _
        // Predicated region
        $region37: #{tpu_custom_call.1} parent=31 // pred_check
          %p326 = pneg %p84
        $region38: #{tpu_custom_call.1} parent=31 // pred_check_branch
          %328 = sbr.rel (%p326) target = $region40
        $region39: #{tpu_custom_call.1} parent=31 // pred_region
          %s329 = smul.u32 16, %s32
          %p330 = scmp.lt.s32.totalorder %s329, 47
          %s331 = scalar_select %p330, %s329, 47
          %s332 = smul.addr %s331, 8
          %s333 = scalar_lea.vmem %s1, %s332
          %s334 = smul.u32 16, %s32
        $region40: #{tpu_custom_call.1} parent=31 // pred_fallthru
          _
        // Predicated region
        $region41: #{tpu_custom_call.1} parent=31 // pred_check
          %p335 = pneg %p110
        $region42: #{tpu_custom_call.1} parent=31 // pred_check_branch
          %337 = sbr.rel (%p335) target = $region44
        $region43: #{tpu_custom_call.1} parent=31 // pred_region
          %s338 = sand.u32 %s24, 1
          %s339 = scalar_lea.sflag [#allocation7], %s338
          %s340 = sand.u32 %s100, 1
          %s341 = smul.addr %s340, 128
          %s342 = scalar_lea.vmem [#allocation6], %s341
          %s343 = smul.u32 16, %s31
          %s345 = ssub.s32 2048, 2048
          %346 = vsyncadd %s339, %s345
          %s347 = smul.addr %s343, 128
          %s348 = scalar_lea.hbm %s2, %s347
          %s349 = sshll.u32 %s342, 4
          %s350 = int_to_ptr.vmem [resolvable:$true] %s349
          %355 = dma.hbm_to_vmem [thread:$0]  %s348, 2048, %s350, %s339, 128, 128, 8
        $region44: #{tpu_custom_call.1} parent=31 // pred_fallthru
          _
        // Predicated region
        $region45: #{tpu_custom_call.1} parent=31 // pred_check
          %p356 = pneg %p136
        $region46: #{tpu_custom_call.1} parent=31 // pred_check_branch
          %358 = sbr.rel (%p356) target = $region48
        $region47: #{tpu_custom_call.1} parent=31 // pred_region
          %s359 = smul.u32 16, %s31
          %p360 = scmp.lt.s32.totalorder %s359, 47
          %s361 = scalar_select %p360, %s359, 47
          %s362 = smul.addr %s361, 8
          %s363 = scalar_lea.vmem %s3, %s362
          %s364 = smul.u32 16, %s31
        $region48: #{tpu_custom_call.1} parent=31 // pred_fallthru
          _
      $region32: #{tpu_custom_call.1} parent=5 // pred_fallthru
        _
      %p365 = scmp.le.s32.totalorder 1, %s24
      %p366 = scmp.lt.s32.totalorder %s24, 10
      %p367 = pnand %p365, %p366
      %p368 = pneg %p367
      // Predicated region
      $region49: #{tpu_custom_call.1} parent=5 // pred_check
        _
      $region50: #{tpu_custom_call.1} parent=5 // pred_check_branch
        %370 = sbr.rel (%p367) target = $region52
      $region51: #{tpu_custom_call.1} parent=5 // pred_region
        %s371 = ssub.s32 %s24, 1
        %s372 = sand.u32 %s51, 1
        %s373 = scalar_lea.sflag [#allocation4], %s372
        %s374 = sand.u32 %s51, 1
        %s375 = smul.addr %s374, 64
        %s376 = scalar_lea.vmem [#allocation3], %s375
        // Predicated region
        $region53: #{tpu_custom_call.1} parent=51 // pred_check
          %p377 = pneg %p64
        $region54: #{tpu_custom_call.1} parent=51 // pred_check_branch
          %379 = sbr.rel (%p377) target = $region56
        $region55: #{tpu_custom_call.1} parent=51 // pred_region
          %380 = dma.done %s373, 1024
        $region56: #{tpu_custom_call.1} parent=51 // pred_fallthru
          _
        %s381 = sand.u32 %s29, 1
        %s382 = scalar_lea.sflag [#allocation7], %s381
        %s383 = sand.u32 %s103, 1
        %s384 = smul.addr %s383, 128
        %s385 = scalar_lea.vmem [#allocation6], %s384
        // Predicated region
        $region57: #{tpu_custom_call.1} parent=51 // pred_check
          %p386 = pneg %p116
        $region58: #{tpu_custom_call.1} parent=51 // pred_check_branch
          %388 = sbr.rel (%p386) target = $region60
        $region59: #{tpu_custom_call.1} parent=51 // pred_region
          %389 = dma.done %s382, 2048
        $region60: #{tpu_custom_call.1} parent=51 // pred_fallthru
          _
        // Predicated region
        $region61: #{tpu_custom_call.1} parent=51 // pred_check
          %p390 = pneg %p163
        $region62: #{tpu_custom_call.1} parent=51 // pred_check_branch
          %392 = sbr.rel (%p390) target = $region64
        $region63: #{tpu_custom_call.1} parent=51 // pred_region
          %393 = dma.done [#allocation7], 2048
        $region64: #{tpu_custom_call.1} parent=51 // pred_fallthru
          _
        // Predicated region
        $region65: #{tpu_custom_call.1} parent=51 // pred_check
          %p394 = pneg %p184
        $region66: #{tpu_custom_call.1} parent=51 // pred_check_branch
          %396 = sbr.rel (%p394) target = $region68
        $region67: #{tpu_custom_call.1} parent=51 // pred_region
          %397 = dma.done [#allocation10], 2048
        $region68: #{tpu_custom_call.1} parent=51 // pred_fallthru
          _
        %s398 = sand.u32 %s51, 1
        %s399 = scalar_lea.sflag [#allocation4], %s398
        %s400 = sand.u32 %s51, 1
        %s401 = smul.addr %s400, 64
        %s402 = scalar_lea.vmem [#allocation3], %s401
        %p403 = pneg %p64
        %p404 = pneg %p61
        %s405 = smul.u32 16, %s34
        %p406 = scmp.lt.s32.totalorder %s405, 47
        %s407 = scalar_select %p406, %s405, 47
        %s408 = smul.addr %s407, 8
        %s409 = scalar_lea.vmem %s1, %s408
        %p410 = pneg %p90
        %p411 = pneg %p87
        %s412 = sand.u32 %s29, 1
        %s413 = scalar_lea.sflag [#allocation7], %s412
        %s414 = sand.u32 %s103, 1
        %s415 = smul.addr %s414, 128
        %s416 = scalar_lea.vmem [#allocation6], %s415
        %p417 = pneg %p116
        %p418 = pneg %p113
        %s419 = smul.u32 16, %s33
        %p420 = scmp.lt.s32.totalorder %s419, 47
        %s421 = scalar_select %p420, %s419, 47
        %s422 = smul.addr %s421, 8
        %s423 = scalar_lea.vmem %s3, %s422
        %p424 = pneg %p142
        %p425 = pneg %p139
        %p426 = pneg %p163
        %p427 = pneg %p160
        %p428 = pneg %p184
        %p429 = pneg %p181
        %p430 = pneg %p205
        %p431 = pneg %p202
        %p432 = pneg %p226
        %p433 = pneg %p223
        %p434 = pneg %p252
        %p435 = pneg %p249
        %s436 = sand.u32 %s239, 1
        %s437 = scalar_lea.sflag [#allocation5], %s436
        %s438 = sand.u32 %s239, 1
        %s439 = smul.addr %s438, 128
        %s440 = scalar_lea.vmem [#allocation11], %s439
        %s441 = smul.u32 16, %s33
        %s442 = smul.u32 16, %s34
        %p443 = scmp.lt.s32.totalorder %s442, 47
        %s444 = scalar_select %p443, %s442, 47
        %s445 = smul.addr %s444, 8
        %s446 = scalar_lea.vmem %s1, %s445
        %s447 = smul.u32 16, %s34
        %s448 = smul.u32 16, %s33
        %s449 = smul.u32 16, %s33
        %p450 = scmp.lt.s32.totalorder %s449, 47
        %s451 = scalar_select %p450, %s449, 47
        %s452 = smul.addr %s451, 8
        %s453 = scalar_lea.vmem %s3, %s452
        %s454 = smul.u32 16, %s33
        %s455 = smul.u32 16, %s33
        %p456 = scmp.eq.s32.totalorder %s34, 0
        // Predicated region
        $region69: #{tpu_custom_call.1} parent=51 // pred_check
          %p457 = pneg %p456
        $region70: #{tpu_custom_call.1} parent=51 // pred_check_branch
          %459 = sbr.rel (%p457) target = $region72
        $region71: #{tpu_custom_call.1} parent=51 // pred_region
          %460 = vst [vmem:[#allocation2] sm:$0xff] 0.0
          %461 = vst [vmem:[#allocation2 + $0x8] sm:$0xff] 0.0
          %462 = vst [vmem:[#allocation2 + $0x10] sm:$0xff] 0.0
          %463 = vst [vmem:[#allocation2 + $0x18] sm:$0xff] 0.0
          %464 = vst [vmem:[#allocation2 + $0x20] sm:$0xff] 0.0
          %465 = vst [vmem:[#allocation2 + $0x28] sm:$0xff] 0.0
          %466 = vst [vmem:[#allocation2 + $0x30] sm:$0xff] 0.0
          %467 = vst [vmem:[#allocation2 + $0x38] sm:$0xff] 0.0
          %468 = vst [vmem:[#allocation2 + $0x40] sm:$0xff] 0.0
          %469 = vst [vmem:[#allocation2 + $0x48] sm:$0xff] 0.0
          %470 = vst [vmem:[#allocation2 + $0x50] sm:$0xff] 0.0
          %471 = vst [vmem:[#allocation2 + $0x58] sm:$0xff] 0.0
          %472 = vst [vmem:[#allocation2 + $0x60] sm:$0xff] 0.0
          %473 = vst [vmem:[#allocation2 + $0x68] sm:$0xff] 0.0
          %474 = vst [vmem:[#allocation2 + $0x70] sm:$0xff] 0.0
          %475 = vst [vmem:[#allocation2 + $0x78] sm:$0xff] 0.0
        $region72: #{tpu_custom_call.1} parent=51 // pred_fallthru
          _
        %v476 = vld [vmem:[%s376] sm:$0xf]
        %v477 = vld [vmem:[%s376 + $0x4] sm:$0xf]
        %v478 = vld [vmem:[%s376 + $0x8] sm:$0xf]
        %v479 = vld [vmem:[%s376 + $0xc] sm:$0xf]
        %v480 = vld [vmem:[%s376 + $0x10] sm:$0xf]
        %v481 = vld [vmem:[%s376 + $0x14] sm:$0xf]
        %v482 = vld [vmem:[%s376 + $0x18] sm:$0xf]
        %v483 = vld [vmem:[%s376 + $0x1c] sm:$0xf]
        %v484 = vld [vmem:[%s376 + $0x20] sm:$0xf]
        %v485 = vld [vmem:[%s376 + $0x24] sm:$0xf]
        %v486 = vld [vmem:[%s376 + $0x28] sm:$0xf]
        %v487 = vld [vmem:[%s376 + $0x2c] sm:$0xf]
        %v488 = vld [vmem:[%s376 + $0x30] sm:$0xf]
        %v489 = vld [vmem:[%s376 + $0x34] sm:$0xf]
        %v490 = vld [vmem:[%s376 + $0x38] sm:$0xf]
        %v491 = vld [vmem:[%s376 + $0x3c] sm:$0xf]
        %v492 = vunpack.c.l.bf16 %v476
        %v493 = vunpack.c.l.bf16 %v477
        %v494 = vunpack.c.l.bf16 %v478
        %v495 = vunpack.c.l.bf16 %v479
        %v496 = vunpack.c.l.bf16 %v480
        %v497 = vunpack.c.l.bf16 %v481
        %v498 = vunpack.c.l.bf16 %v482
        %v499 = vunpack.c.l.bf16 %v483
        %v500 = vunpack.c.l.bf16 %v484
        %v501 = vunpack.c.l.bf16 %v485
        %v502 = vunpack.c.l.bf16 %v486
        %v503 = vunpack.c.l.bf16 %v487
        %v504 = vunpack.c.l.bf16 %v488
        %v505 = vunpack.c.l.bf16 %v489
        %v506 = vunpack.c.l.bf16 %v490
        %v507 = vunpack.c.l.bf16 %v491
        %v508 = vld [vmem:[#allocation2] sm:$0xff]
        %v509 = vld [vmem:[#allocation2 + $0x8] sm:$0xff]
        %v510 = vld [vmem:[#allocation2 + $0x10] sm:$0xff]
        %v511 = vld [vmem:[#allocation2 + $0x18] sm:$0xff]
        %v512 = vld [vmem:[#allocation2 + $0x20] sm:$0xff]
        %v513 = vld [vmem:[#allocation2 + $0x28] sm:$0xff]
        %v514 = vld [vmem:[#allocation2 + $0x30] sm:$0xff]
        %v515 = vld [vmem:[#allocation2 + $0x38] sm:$0xff]
        %v516 = vld [vmem:[#allocation2 + $0x40] sm:$0xff]
        %v517 = vld [vmem:[#allocation2 + $0x48] sm:$0xff]
        %v518 = vld [vmem:[#allocation2 + $0x50] sm:$0xff]
        %v519 = vld [vmem:[#allocation2 + $0x58] sm:$0xff]
        %v520 = vld [vmem:[#allocation2 + $0x60] sm:$0xff]
        %v521 = vld [vmem:[#allocation2 + $0x68] sm:$0xff]
        %v522 = vld [vmem:[#allocation2 + $0x70] sm:$0xff]
        %v523 = vld [vmem:[#allocation2 + $0x78] sm:$0xff]
        %v524 = vld [vmem:[%s446] sm:$0xff]
        %v525 = vld [vmem:[%s446 + $0x8] sm:$0xff]
        %v526 = vld [vmem:[%s446 + $0x10] sm:$0xff]
        %v527 = vld [vmem:[%s446 + $0x18] sm:$0xff]
        %v528 = vld [vmem:[%s446 + $0x20] sm:$0xff]
        %v529 = vld [vmem:[%s446 + $0x28] sm:$0xff]
        %v530 = vld [vmem:[%s446 + $0x30] sm:$0xff]
        %v531 = vld [vmem:[%s446 + $0x38] sm:$0xff]
        %v532 = vld [vmem:[%s446 + $0x40] sm:$0xff]
        %v533 = vld [vmem:[%s446 + $0x48] sm:$0xff]
        %v534 = vld [vmem:[%s446 + $0x50] sm:$0xff]
        %v535 = vld [vmem:[%s446 + $0x58] sm:$0xff]
        %v536 = vld [vmem:[%s446 + $0x60] sm:$0xff]
        %v537 = vld [vmem:[%s446 + $0x68] sm:$0xff]
        %v538 = vld [vmem:[%s446 + $0x70] sm:$0xff]
        %v539 = vld [vmem:[%s446 + $0x78] sm:$0xff]
        %540 = vmatprep.subr.mxu0 0.0
        %541 = vmatpush1.msra.mxu0 %v524
        %542 = vmatprep.subr.mxu0 0.0
        %543 = vmatpush1.msra.mxu0 %v525
        %544 = vmatprep.subr.mxu0 0.0
        %545 = vmatpush1.msra.mxu0 %v526
        %546 = vmatprep.subr.mxu0 0.0
        %547 = vmatpush1.msra.mxu0 %v527
        %548 = vmatprep.subr.mxu0 0.0
        %549 = vmatpush1.msra.mxu0 %v528
        %550 = vmatprep.subr.mxu0 0.0
        %551 = vmatpush1.msra.mxu0 %v529
        %552 = vmatprep.subr.mxu0 0.0
        %553 = vmatpush1.msra.mxu0 %v530
        %554 = vmatprep.subr.mxu0 0.0
        %555 = vmatpush1.msra.mxu0 %v531
        %556 = vmatprep.subr.mxu0 0.0
        %557 = vmatpush1.msra.mxu0 %v532
        %558 = vmatprep.subr.mxu0 0.0
        %559 = vmatpush1.msra.mxu0 %v533
        %560 = vmatprep.subr.mxu0 0.0
        %561 = vmatpush1.msra.mxu0 %v534
        %562 = vmatprep.subr.mxu0 0.0
        %563 = vmatpush1.msra.mxu0 %v535
        %564 = vmatprep.subr.mxu0 0.0
        %565 = vmatpush1.msra.mxu0 %v536
        %566 = vmatprep.subr.mxu0 0.0
        %567 = vmatpush1.msra.mxu0 %v537
        %568 = vmatprep.subr.mxu0 0.0
        %569 = vmatpush1.msra.mxu0 %v538
        %570 = vmatprep.subr.mxu0 0.0
        %571 = vmatpush1.msra.mxu0 %v539
        %572 = vmatprep.subr.mxu0 0.0
        %573 = vmatpush1.msra.mxu0 0.0
        %574 = vmatprep.subr.mxu0 0.0
        %575 = vmatpush1.msra.mxu0 0.0
        %576 = vmatprep.subr.mxu0 0.0
        %577 = vmatpush1.msra.mxu0 0.0
        %578 = vmatprep.subr.mxu0 0.0
        %579 = vmatpush1.msra.mxu0 0.0
        %580 = vmatprep.subr.mxu0 0.0
        %581 = vmatpush1.msra.mxu0 0.0
        %582 = vmatprep.subr.mxu0 0.0
        %583 = vmatpush1.msra.mxu0 0.0
        %584 = vmatprep.subr.mxu0 0.0
        %585 = vmatpush1.msra.mxu0 0.0
        %586 = vmatprep.subr.mxu0 0.0
        %587 = vmatpush1.msra.mxu0 0.0
        %588 = vmatprep.subr.mxu0 0.0
        %589 = vmatpush1.msra.mxu0 0.0
        %590 = vmatprep.subr.mxu0 0.0
        %591 = vmatpush1.msra.mxu0 0.0
        %592 = vmatprep.subr.mxu0 0.0
        %593 = vmatpush1.msra.mxu0 0.0
        %594 = vmatprep.subr.mxu0 0.0
        %595 = vmatpush1.msra.mxu0 0.0
        %596 = vmatprep.subr.mxu0 0.0
        %597 = vmatpush1.msra.mxu0 0.0
        %598 = vmatprep.subr.mxu0 0.0
        %599 = vmatpush1.msra.mxu0 0.0
        %600 = vmatprep.subr.mxu0 0.0
        %601 = vmatpush1.msra.mxu0 0.0
        %602 = vmatprep.subr.mxu0 0.0
        %603 = vmatpush1.msra.mxu0 0.0
        %604 = vmatprep.mubr.f32.mxu0 0.0
        %605 = vmatmul.mubr.f32.gmra.mrb[0].mxu0 %v492
        %v606 = vpop.f32.mrb[0].mxu0
        %v607 = vadd.f32 0.0, %v606
        %v608 = vpop.f32.mrb[0].mxu0
        %609 = vmatprep.mubr.f32.mxu0 0.0
        %610 = vmatmul.mubr.f32.gmra.mrb[0].mxu0 %v493
        %v611 = vpop.f32.mrb[0].mxu0
        %v612 = vadd.f32 0.0, %v611
        %v613 = vpop.f32.mrb[0].mxu0
        %614 = vmatprep.mubr.f32.mxu0 0.0
        %615 = vmatmul.mubr.f32.gmra.mrb[0].mxu0 %v494
        %v616 = vpop.f32.mrb[0].mxu0
        %v617 = vadd.f32 0.0, %v616
        %v618 = vpop.f32.mrb[0].mxu0
        %619 = vmatprep.mubr.f32.mxu0 0.0
        %620 = vmatmul.mubr.f32.gmra.mrb[0].mxu0 %v495
        %v621 = vpop.f32.mrb[0].mxu0
        %v622 = vadd.f32 0.0, %v621
        %v623 = vpop.f32.mrb[0].mxu0
        %624 = vmatprep.mubr.f32.mxu0 0.0
        %625 = vmatmul.mubr.f32.gmra.mrb[0].mxu0 %v496
        %v626 = vpop.f32.mrb[0].mxu0
        %v627 = vadd.f32 0.0, %v626
        %v628 = vpop.f32.mrb[0].mxu0
        %629 = vmatprep.mubr.f32.mxu0 0.0
        %630 = vmatmul.mubr.f32.gmra.mrb[0].mxu0 %v497
        %v631 = vpop.f32.mrb[0].mxu0
        %v632 = vadd.f32 0.0, %v631
        %v633 = vpop.f32.mrb[0].mxu0
        %634 = vmatprep.mubr.f32.mxu0 0.0
        %635 = vmatmul.mubr.f32.gmra.mrb[0].mxu0 %v498
        %v636 = vpop.f32.mrb[0].mxu0
        %v637 = vadd.f32 0.0, %v636
        %v638 = vpop.f32.mrb[0].mxu0
        %639 = vmatprep.mubr.f32.mxu0 0.0
        %640 = vmatmul.mubr.f32.gmra.mrb[0].mxu0 %v499
        %v641 = vpop.f32.mrb[0].mxu0
        %v642 = vadd.f32 0.0, %v641
        %v643 = vpop.f32.mrb[0].mxu0
        %644 = vmatprep.mubr.f32.mxu0 0.0
        %645 = vmatmul.mubr.f32.gmra.mrb[0].mxu0 %v500
        %v646 = vpop.f32.mrb[0].mxu0
        %v647 = vadd.f32 0.0, %v646
        %v648 = vpop.f32.mrb[0].mxu0
        %649 = vmatprep.mubr.f32.mxu0 0.0
        %650 = vmatmul.mubr.f32.gmra.mrb[0].mxu0 %v501
        %v651 = vpop.f32.mrb[0].mxu0
        %v652 = vadd.f32 0.0, %v651
        %v653 = vpop.f32.mrb[0].mxu0
        %654 = vmatprep.mubr.f32.mxu0 0.0
        %655 = vmatmul.mubr.f32.gmra.mrb[0].mxu0 %v502
        %v656 = vpop.f32.mrb[0].mxu0
        %v657 = vadd.f32 0.0, %v656
        %v658 = vpop.f32.mrb[0].mxu0
        %659 = vmatprep.mubr.f32.mxu0 0.0
        %660 = vmatmul.mubr.f32.gmra.mrb[0].mxu0 %v503
        %v661 = vpop.f32.mrb[0].mxu0
        %v662 = vadd.f32 0.0, %v661
        %v663 = vpop.f32.mrb[0].mxu0
        %664 = vmatprep.mubr.f32.mxu0 0.0
        %665 = vmatmul.mubr.f32.gmra.mrb[0].mxu0 %v504
        %v666 = vpop.f32.mrb[0].mxu0
        %v667 = vadd.f32 0.0, %v666
        %v668 = vpop.f32.mrb[0].mxu0
        %669 = vmatprep.mubr.f32.mxu0 0.0
        %670 = vmatmul.mubr.f32.gmra.mrb[0].mxu0 %v505
        %v671 = vpop.f32.mrb[0].mxu0
        %v672 = vadd.f32 0.0, %v671
        %v673 = vpop.f32.mrb[0].mxu0
        %674 = vmatprep.mubr.f32.mxu0 0.0
        %675 = vmatmul.mubr.f32.gmra.mrb[0].mxu0 %v506
        %v676 = vpop.f32.mrb[0].mxu0
        %v677 = vadd.f32 0.0, %v676
        %v678 = vpop.f32.mrb[0].mxu0
        %679 = vmatprep.mubr.f32.mxu0 0.0
        %680 = vmatmul.mubr.f32.gmra.mrb[0].mxu0 %v507
        %v681 = vpop.f32.mrb[0].mxu0
        %v682 = vadd.f32 0.0, %v681
        %v683 = vpop.f32.mrb[0].mxu0
        %684 = vdwg.mxu0
        %v685 = vadd.f32 %v508, %v607
        %v686 = vadd.f32 %v509, %v612
        %v687 = vadd.f32 %v510, %v617
        %v688 = vadd.f32 %v511, %v622
        %v689 = vadd.f32 %v512, %v627
        %v690 = vadd.f32 %v513, %v632
        %v691 = vadd.f32 %v514, %v637
        %v692 = vadd.f32 %v515, %v642
        %v693 = vadd.f32 %v516, %v647
        %v694 = vadd.f32 %v517, %v652
        %v695 = vadd.f32 %v518, %v657
        %v696 = vadd.f32 %v519, %v662
        %v697 = vadd.f32 %v520, %v667
        %v698 = vadd.f32 %v521, %v672
        %v699 = vadd.f32 %v522, %v677
        %v700 = vadd.f32 %v523, %v682
        %701 = vst [vmem:[#allocation2] sm:$0xff] %v685
        %702 = vst [vmem:[#allocation2 + $0x8] sm:$0xff] %v686
        %703 = vst [vmem:[#allocation2 + $0x10] sm:$0xff] %v687
        %704 = vst [vmem:[#allocation2 + $0x18] sm:$0xff] %v688
        %705 = vst [vmem:[#allocation2 + $0x20] sm:$0xff] %v689
        %706 = vst [vmem:[#allocation2 + $0x28] sm:$0xff] %v690
        %707 = vst [vmem:[#allocation2 + $0x30] sm:$0xff] %v691
        %708 = vst [vmem:[#allocation2 + $0x38] sm:$0xff] %v692
        %709 = vst [vmem:[#allocation2 + $0x40] sm:$0xff] %v693
        %710 = vst [vmem:[#allocation2 + $0x48] sm:$0xff] %v694
        %711 = vst [vmem:[#allocation2 + $0x50] sm:$0xff] %v695
        %712 = vst [vmem:[#allocation2 + $0x58] sm:$0xff] %v696
        %713 = vst [vmem:[#allocation2 + $0x60] sm:$0xff] %v697
        %714 = vst [vmem:[#allocation2 + $0x68] sm:$0xff] %v698
        %715 = vst [vmem:[#allocation2 + $0x70] sm:$0xff] %v699
        %716 = vst [vmem:[#allocation2 + $0x78] sm:$0xff] %v700
        %p717 = scmp.eq.s32.totalorder %s34, 2
        // Predicated region
        $region73: #{tpu_custom_call.1} parent=51 // pred_check
          %p718 = pneg %p717
        $region74: #{tpu_custom_call.1} parent=51 // pred_check_branch
          %720 = sbr.rel (%p718) target = $region76
        $region75: #{tpu_custom_call.1} parent=51 // pred_region
          %v721 = vld [vmem:[#allocation2] sm:$0xff]
          %v722 = vld [vmem:[#allocation2 + $0x8] sm:$0xff]
          %v723 = vld [vmem:[#allocation2 + $0x10] sm:$0xff]
          %v724 = vld [vmem:[#allocation2 + $0x18] sm:$0xff]
          %v725 = vld [vmem:[#allocation2 + $0x20] sm:$0xff]
          %v726 = vld [vmem:[#allocation2 + $0x28] sm:$0xff]
          %v727 = vld [vmem:[#allocation2 + $0x30] sm:$0xff]
          %v728 = vld [vmem:[#allocation2 + $0x38] sm:$0xff]
          %v729 = vld [vmem:[#allocation2 + $0x40] sm:$0xff]
          %v730 = vld [vmem:[#allocation2 + $0x48] sm:$0xff]
          %v731 = vld [vmem:[#allocation2 + $0x50] sm:$0xff]
          %v732 = vld [vmem:[#allocation2 + $0x58] sm:$0xff]
          %v733 = vld [vmem:[#allocation2 + $0x60] sm:$0xff]
          %v734 = vld [vmem:[#allocation2 + $0x68] sm:$0xff]
          %v735 = vld [vmem:[#allocation2 + $0x70] sm:$0xff]
          %v736 = vld [vmem:[#allocation2 + $0x78] sm:$0xff]
          %v737 = vld [vmem:[%s385] sm:$0xff]
          %v738 = vld [vmem:[%s385 + $0x8] sm:$0xff]
          %v739 = vld [vmem:[%s385 + $0x10] sm:$0xff]
          %v740 = vld [vmem:[%s385 + $0x18] sm:$0xff]
          %v741 = vld [vmem:[%s385 + $0x20] sm:$0xff]
          %v742 = vld [vmem:[%s385 + $0x28] sm:$0xff]
          %v743 = vld [vmem:[%s385 + $0x30] sm:$0xff]
          %v744 = vld [vmem:[%s385 + $0x38] sm:$0xff]
          %v745 = vld [vmem:[%s385 + $0x40] sm:$0xff]
          %v746 = vld [vmem:[%s385 + $0x48] sm:$0xff]
          %v747 = vld [vmem:[%s385 + $0x50] sm:$0xff]
          %v748 = vld [vmem:[%s385 + $0x58] sm:$0xff]
          %v749 = vld [vmem:[%s385 + $0x60] sm:$0xff]
          %v750 = vld [vmem:[%s385 + $0x68] sm:$0xff]
          %v751 = vld [vmem:[%s385 + $0x70] sm:$0xff]
          %v752 = vld [vmem:[%s385 + $0x78] sm:$0xff]
          %v753 = vld [vmem:[%s453] sm:$0xff]
          %v754 = vld [vmem:[%s453 + $0x8] sm:$0xff]
          %v755 = vld [vmem:[%s453 + $0x10] sm:$0xff]
          %v756 = vld [vmem:[%s453 + $0x18] sm:$0xff]
          %v757 = vld [vmem:[%s453 + $0x20] sm:$0xff]
          %v758 = vld [vmem:[%s453 + $0x28] sm:$0xff]
          %v759 = vld [vmem:[%s453 + $0x30] sm:$0xff]
          %v760 = vld [vmem:[%s453 + $0x38] sm:$0xff]
          %v761 = vld [vmem:[%s453 + $0x40] sm:$0xff]
          %v762 = vld [vmem:[%s453 + $0x48] sm:$0xff]
          %v763 = vld [vmem:[%s453 + $0x50] sm:$0xff]
          %v764 = vld [vmem:[%s453 + $0x58] sm:$0xff]
          %v765 = vld [vmem:[%s453 + $0x60] sm:$0xff]
          %v766 = vld [vmem:[%s453 + $0x68] sm:$0xff]
          %v767 = vld [vmem:[%s453 + $0x70] sm:$0xff]
          %v768 = vld [vmem:[%s453 + $0x78] sm:$0xff]
          %v769 = vmax.f32 %v753, 1.0
          %v770 = vmax.f32 %v754, 1.0
          %v771 = vmax.f32 %v755, 1.0
          %v772 = vmax.f32 %v756, 1.0
          %v773 = vmax.f32 %v757, 1.0
          %v774 = vmax.f32 %v758, 1.0
          %v775 = vmax.f32 %v759, 1.0
          %v776 = vmax.f32 %v760, 1.0
          %v777 = vmax.f32 %v761, 1.0
          %v778 = vmax.f32 %v762, 1.0
          %v779 = vmax.f32 %v763, 1.0
          %v780 = vmax.f32 %v764, 1.0
          %v781 = vmax.f32 %v765, 1.0
          %v782 = vmax.f32 %v766, 1.0
          %v783 = vmax.f32 %v767, 1.0
          %v784 = vmax.f32 %v768, 1.0
          %v785 = vrsqrt.pop %v769
          %v786 = vrsqrt.pop %v770
          %v787 = vrsqrt.pop %v771
          %v788 = vrsqrt.pop %v772
          %v789 = vrsqrt.pop %v773
          %v790 = vrsqrt.pop %v774
          %v791 = vrsqrt.pop %v775
          %v792 = vrsqrt.pop %v776
          %v793 = vrsqrt.pop %v777
          %v794 = vrsqrt.pop %v778
          %v795 = vrsqrt.pop %v779
          %v796 = vrsqrt.pop %v780
          %v797 = vrsqrt.pop %v781
          %v798 = vrsqrt.pop %v782
          %v799 = vrsqrt.pop %v783
          %v800 = vrsqrt.pop %v784
          %802 = vset.pattern.permute.xlu0 0
          %803 = vperm.xlu0 %802, %v785
          %v804 = vpop.permute.xlu0 %803
          %807 = vset.pattern.permute.xlu0 0
          %808 = vperm.xlu0 %807, %v786
          %v809 = vpop.permute.xlu0 %808
          %812 = vset.pattern.permute.xlu0 0
          %813 = vperm.xlu0 %812, %v787
          %v814 = vpop.permute.xlu0 %813
          %817 = vset.pattern.permute.xlu0 0
          %818 = vperm.xlu0 %817, %v788
          %v819 = vpop.permute.xlu0 %818
          %822 = vset.pattern.permute.xlu0 0
          %823 = vperm.xlu0 %822, %v789
          %v824 = vpop.permute.xlu0 %823
          %827 = vset.pattern.permute.xlu0 0
          %828 = vperm.xlu0 %827, %v790
          %v829 = vpop.permute.xlu0 %828
          %832 = vset.pattern.permute.xlu0 0
          %833 = vperm.xlu0 %832, %v791
          %v834 = vpop.permute.xlu0 %833
          %837 = vset.pattern.permute.xlu0 0
          %838 = vperm.xlu0 %837, %v792
          %v839 = vpop.permute.xlu0 %838
          %842 = vset.pattern.permute.xlu0 0
          %843 = vperm.xlu0 %842, %v793
          %v844 = vpop.permute.xlu0 %843
          %847 = vset.pattern.permute.xlu0 0
          %848 = vperm.xlu0 %847, %v794
          %v849 = vpop.permute.xlu0 %848
          %852 = vset.pattern.permute.xlu0 0
          %853 = vperm.xlu0 %852, %v795
          %v854 = vpop.permute.xlu0 %853
          %857 = vset.pattern.permute.xlu0 0
          %858 = vperm.xlu0 %857, %v796
          %v859 = vpop.permute.xlu0 %858
          %862 = vset.pattern.permute.xlu0 0
          %863 = vperm.xlu0 %862, %v797
          %v864 = vpop.permute.xlu0 %863
          %867 = vset.pattern.permute.xlu0 0
          %868 = vperm.xlu0 %867, %v798
          %v869 = vpop.permute.xlu0 %868
          %872 = vset.pattern.permute.xlu0 0
          %873 = vperm.xlu0 %872, %v799
          %v874 = vpop.permute.xlu0 %873
          %877 = vset.pattern.permute.xlu0 0
          %878 = vperm.xlu0 %877, %v800
          %v879 = vpop.permute.xlu0 %878
          %v881 = vmul.f32 %v804, %v721
          %v882 = vmul.f32 %v809, %v722
          %v883 = vmul.f32 %v814, %v723
          %v884 = vmul.f32 %v819, %v724
          %v885 = vmul.f32 %v824, %v725
          %v886 = vmul.f32 %v829, %v726
          %v887 = vmul.f32 %v834, %v727
          %v888 = vmul.f32 %v839, %v728
          %v889 = vmul.f32 %v844, %v729
          %v890 = vmul.f32 %v849, %v730
          %v891 = vmul.f32 %v854, %v731
          %v892 = vmul.f32 %v859, %v732
          %v893 = vmul.f32 %v864, %v733
          %v894 = vmul.f32 %v869, %v734
          %v895 = vmul.f32 %v874, %v735
          %v896 = vmul.f32 %v879, %v736
          %v897 = vadd.f32 %v881, %v737
          %v898 = vadd.f32 %v882, %v738
          %v899 = vadd.f32 %v883, %v739
          %v900 = vadd.f32 %v884, %v740
          %v901 = vadd.f32 %v885, %v741
          %v902 = vadd.f32 %v886, %v742
          %v903 = vadd.f32 %v887, %v743
          %v904 = vadd.f32 %v888, %v744
          %v905 = vadd.f32 %v889, %v745
          %v906 = vadd.f32 %v890, %v746
          %v907 = vadd.f32 %v891, %v747
          %v908 = vadd.f32 %v892, %v748
          %v909 = vadd.f32 %v893, %v749
          %v910 = vadd.f32 %v894, %v750
          %v911 = vadd.f32 %v895, %v751
          %v912 = vadd.f32 %v896, %v752
          %v913 = vmul.f32 %v721, %v737
          %v914 = vmul.f32 %v722, %v738
          %v915 = vmul.f32 %v723, %v739
          %v916 = vmul.f32 %v724, %v740
          %v917 = vmul.f32 %v725, %v741
          %v918 = vmul.f32 %v726, %v742
          %v919 = vmul.f32 %v727, %v743
          %v920 = vmul.f32 %v728, %v744
          %v921 = vmul.f32 %v729, %v745
          %v922 = vmul.f32 %v730, %v746
          %v923 = vmul.f32 %v731, %v747
          %v924 = vmul.f32 %v732, %v748
          %v925 = vmul.f32 %v733, %v749
          %v926 = vmul.f32 %v734, %v750
          %v927 = vmul.f32 %v735, %v751
          %v928 = vmul.f32 %v736, %v752
          %v929 = vld [vmem:[#allocation9] sm:$0xff]
          %v930 = vld [vmem:[#allocation9 + $0x8] sm:$0xff]
          %v931 = vld [vmem:[#allocation9 + $0x10] sm:$0xff]
          %v932 = vld [vmem:[#allocation9 + $0x18] sm:$0xff]
          %v933 = vld [vmem:[#allocation9 + $0x20] sm:$0xff]
          %v934 = vld [vmem:[#allocation9 + $0x28] sm:$0xff]
          %v935 = vld [vmem:[#allocation9 + $0x30] sm:$0xff]
          %v936 = vld [vmem:[#allocation9 + $0x38] sm:$0xff]
          %v937 = vld [vmem:[#allocation9 + $0x40] sm:$0xff]
          %v938 = vld [vmem:[#allocation9 + $0x48] sm:$0xff]
          %v939 = vld [vmem:[#allocation9 + $0x50] sm:$0xff]
          %v940 = vld [vmem:[#allocation9 + $0x58] sm:$0xff]
          %v941 = vld [vmem:[#allocation9 + $0x60] sm:$0xff]
          %v942 = vld [vmem:[#allocation9 + $0x68] sm:$0xff]
          %v943 = vld [vmem:[#allocation9 + $0x70] sm:$0xff]
          %v944 = vld [vmem:[#allocation9 + $0x78] sm:$0xff]
          %v945 = vld [vmem:[#allocation8] sm:$0xff]
          %v946 = vld [vmem:[#allocation8 + $0x8] sm:$0xff]
          %v947 = vld [vmem:[#allocation8 + $0x10] sm:$0xff]
          %v948 = vld [vmem:[#allocation8 + $0x18] sm:$0xff]
          %v949 = vld [vmem:[#allocation8 + $0x20] sm:$0xff]
          %v950 = vld [vmem:[#allocation8 + $0x28] sm:$0xff]
          %v951 = vld [vmem:[#allocation8 + $0x30] sm:$0xff]
          %v952 = vld [vmem:[#allocation8 + $0x38] sm:$0xff]
          %v953 = vld [vmem:[#allocation8 + $0x40] sm:$0xff]
          %v954 = vld [vmem:[#allocation8 + $0x48] sm:$0xff]
          %v955 = vld [vmem:[#allocation8 + $0x50] sm:$0xff]
          %v956 = vld [vmem:[#allocation8 + $0x58] sm:$0xff]
          %v957 = vld [vmem:[#allocation8 + $0x60] sm:$0xff]
          %v958 = vld [vmem:[#allocation8 + $0x68] sm:$0xff]
          %v959 = vld [vmem:[#allocation8 + $0x70] sm:$0xff]
          %v960 = vld [vmem:[#allocation8 + $0x78] sm:$0xff]
          %961 = vmatprep.subr.mxu0 0.0
          %962 = vmatpush1.msra.mxu0 %v945
          %963 = vmatprep.subr.mxu0 0.0
          %964 = vmatpush1.msra.mxu0 %v946
          %965 = vmatprep.subr.mxu0 0.0
          %966 = vmatpush1.msra.mxu0 %v947
          %967 = vmatprep.subr.mxu0 0.0
          %968 = vmatpush1.msra.mxu0 %v948
          %969 = vmatprep.subr.mxu0 0.0
          %970 = vmatpush1.msra.mxu0 %v949
          %971 = vmatprep.subr.mxu0 0.0
          %972 = vmatpush1.msra.mxu0 %v950
          %973 = vmatprep.subr.mxu0 0.0
          %974 = vmatpush1.msra.mxu0 %v951
          %975 = vmatprep.subr.mxu0 0.0
          %976 = vmatpush1.msra.mxu0 %v952
          %977 = vmatprep.subr.mxu0 0.0
          %978 = vmatpush1.msra.mxu0 %v953
          %979 = vmatprep.subr.mxu0 0.0
          %980 = vmatpush1.msra.mxu0 %v954
          %981 = vmatprep.subr.mxu0 0.0
          %982 = vmatpush1.msra.mxu0 %v955
          %983 = vmatprep.subr.mxu0 0.0
          %984 = vmatpush1.msra.mxu0 %v956
          %985 = vmatprep.subr.mxu0 0.0
          %986 = vmatpush1.msra.mxu0 %v957
          %987 = vmatprep.subr.mxu0 0.0
          %988 = vmatpush1.msra.mxu0 %v958
          %989 = vmatprep.subr.mxu0 0.0
          %990 = vmatpush1.msra.mxu0 %v959
          %991 = vmatprep.subr.mxu0 0.0
          %992 = vmatpush1.msra.mxu0 %v960
          %993 = vmatprep.subr.mxu0 0.0
          %994 = vmatpush1.msra.mxu0 0.0
          %995 = vmatprep.subr.mxu0 0.0
          %996 = vmatpush1.msra.mxu0 0.0
          %997 = vmatprep.subr.mxu0 0.0
          %998 = vmatpush1.msra.mxu0 0.0
          %999 = vmatprep.subr.mxu0 0.0
          %1000 = vmatpush1.msra.mxu0 0.0
          %1001 = vmatprep.subr.mxu0 0.0
          %1002 = vmatpush1.msra.mxu0 0.0
          %1003 = vmatprep.subr.mxu0 0.0
          %1004 = vmatpush1.msra.mxu0 0.0
          %1005 = vmatprep.subr.mxu0 0.0
          %1006 = vmatpush1.msra.mxu0 0.0
          %1007 = vmatprep.subr.mxu0 0.0
          %1008 = vmatpush1.msra.mxu0 0.0
          %1009 = vmatprep.subr.mxu0 0.0
          %1010 = vmatpush1.msra.mxu0 0.0
          %1011 = vmatprep.subr.mxu0 0.0
          %1012 = vmatpush1.msra.mxu0 0.0
          %1013 = vmatprep.subr.mxu0 0.0
          %1014 = vmatpush1.msra.mxu0 0.0
          %1015 = vmatprep.subr.mxu0 0.0
          %1016 = vmatpush1.msra.mxu0 0.0
          %1017 = vmatprep.subr.mxu0 0.0
          %1018 = vmatpush1.msra.mxu0 0.0
          %1019 = vmatprep.subr.mxu0 0.0
          %1020 = vmatpush1.msra.mxu0 0.0
          %1021 = vmatprep.subr.mxu0 0.0
          %1022 = vmatpush1.msra.mxu0 0.0
          %1023 = vmatprep.subr.mxu0 0.0
          %1024 = vmatpush1.msra.mxu0 0.0
          %1025 = vmatprep.mubr.f32.mxu0 0.0
          %1026 = vmatmul.mubr.f32.gmra.mrb[0].mxu0 %v913
          %v1027 = vpop.f32.mrb[0].mxu0
          %v1028 = vadd.f32 0.0, %v1027
          %v1029 = vpop.f32.mrb[0].mxu0
          %1030 = vmatprep.mubr.f32.mxu0 0.0
          %1031 = vmatmul.mubr.f32.gmra.mrb[0].mxu0 %v914
          %v1032 = vpop.f32.mrb[0].mxu0
          %v1033 = vadd.f32 0.0, %v1032
          %v1034 = vpop.f32.mrb[0].mxu0
          %1035 = vmatprep.mubr.f32.mxu0 0.0
          %1036 = vmatmul.mubr.f32.gmra.mrb[0].mxu0 %v915
          %v1037 = vpop.f32.mrb[0].mxu0
          %v1038 = vadd.f32 0.0, %v1037
          %v1039 = vpop.f32.mrb[0].mxu0
          %1040 = vmatprep.mubr.f32.mxu0 0.0
          %1041 = vmatmul.mubr.f32.gmra.mrb[0].mxu0 %v916
          %v1042 = vpop.f32.mrb[0].mxu0
          %v1043 = vadd.f32 0.0, %v1042
          %v1044 = vpop.f32.mrb[0].mxu0
          %1045 = vmatprep.mubr.f32.mxu0 0.0
          %1046 = vmatmul.mubr.f32.gmra.mrb[0].mxu0 %v917
          %v1047 = vpop.f32.mrb[0].mxu0
          %v1048 = vadd.f32 0.0, %v1047
          %v1049 = vpop.f32.mrb[0].mxu0
          %1050 = vmatprep.mubr.f32.mxu0 0.0
          %1051 = vmatmul.mubr.f32.gmra.mrb[0].mxu0 %v918
          %v1052 = vpop.f32.mrb[0].mxu0
          %v1053 = vadd.f32 0.0, %v1052
          %v1054 = vpop.f32.mrb[0].mxu0
          %1055 = vmatprep.mubr.f32.mxu0 0.0
          %1056 = vmatmul.mubr.f32.gmra.mrb[0].mxu0 %v919
          %v1057 = vpop.f32.mrb[0].mxu0
          %v1058 = vadd.f32 0.0, %v1057
          %v1059 = vpop.f32.mrb[0].mxu0
          %1060 = vmatprep.mubr.f32.mxu0 0.0
          %1061 = vmatmul.mubr.f32.gmra.mrb[0].mxu0 %v920
          %v1062 = vpop.f32.mrb[0].mxu0
          %v1063 = vadd.f32 0.0, %v1062
          %v1064 = vpop.f32.mrb[0].mxu0
          %1065 = vmatprep.mubr.f32.mxu0 0.0
          %1066 = vmatmul.mubr.f32.gmra.mrb[0].mxu0 %v921
          %v1067 = vpop.f32.mrb[0].mxu0
          %v1068 = vadd.f32 0.0, %v1067
          %v1069 = vpop.f32.mrb[0].mxu0
          %1070 = vmatprep.mubr.f32.mxu0 0.0
          %1071 = vmatmul.mubr.f32.gmra.mrb[0].mxu0 %v922
          %v1072 = vpop.f32.mrb[0].mxu0
          %v1073 = vadd.f32 0.0, %v1072
          %v1074 = vpop.f32.mrb[0].mxu0
          %1075 = vmatprep.mubr.f32.mxu0 0.0
          %1076 = vmatmul.mubr.f32.gmra.mrb[0].mxu0 %v923
          %v1077 = vpop.f32.mrb[0].mxu0
          %v1078 = vadd.f32 0.0, %v1077
          %v1079 = vpop.f32.mrb[0].mxu0
          %1080 = vmatprep.mubr.f32.mxu0 0.0
          %1081 = vmatmul.mubr.f32.gmra.mrb[0].mxu0 %v924
          %v1082 = vpop.f32.mrb[0].mxu0
          %v1083 = vadd.f32 0.0, %v1082
          %v1084 = vpop.f32.mrb[0].mxu0
          %1085 = vmatprep.mubr.f32.mxu0 0.0
          %1086 = vmatmul.mubr.f32.gmra.mrb[0].mxu0 %v925
          %v1087 = vpop.f32.mrb[0].mxu0
          %v1088 = vadd.f32 0.0, %v1087
          %v1089 = vpop.f32.mrb[0].mxu0
          %1090 = vmatprep.mubr.f32.mxu0 0.0
          %1091 = vmatmul.mubr.f32.gmra.mrb[0].mxu0 %v926
          %v1092 = vpop.f32.mrb[0].mxu0
          %v1093 = vadd.f32 0.0, %v1092
          %v1094 = vpop.f32.mrb[0].mxu0
          %1095 = vmatprep.mubr.f32.mxu0 0.0
          %1096 = vmatmul.mubr.f32.gmra.mrb[0].mxu0 %v927
          %v1097 = vpop.f32.mrb[0].mxu0
          %v1098 = vadd.f32 0.0, %v1097
          %v1099 = vpop.f32.mrb[0].mxu0
          %1100 = vmatprep.mubr.f32.mxu0 0.0
          %1101 = vmatmul.mubr.f32.gmra.mrb[0].mxu0 %v928
          %v1102 = vpop.f32.mrb[0].mxu0
          %v1103 = vadd.f32 0.0, %v1102
          %v1104 = vpop.f32.mrb[0].mxu0
          %1105 = vdwg.mxu0
          %v1106 = vmul.f32 %v804, %v1028
          %v1107 = vmul.f32 %v809, %v1033
          %v1108 = vmul.f32 %v814, %v1038
          %v1109 = vmul.f32 %v819, %v1043
          %v1110 = vmul.f32 %v824, %v1048
          %v1111 = vmul.f32 %v829, %v1053
          %v1112 = vmul.f32 %v834, %v1058
          %v1113 = vmul.f32 %v839, %v1063
          %v1114 = vmul.f32 %v844, %v1068
          %v1115 = vmul.f32 %v849, %v1073
          %v1116 = vmul.f32 %v854, %v1078
          %v1117 = vmul.f32 %v859, %v1083
          %v1118 = vmul.f32 %v864, %v1088
          %v1119 = vmul.f32 %v869, %v1093
          %v1120 = vmul.f32 %v874, %v1098
          %v1121 = vmul.f32 %v879, %v1103
          %1122 = vmatprep.subr.mxu0 0.0
          %1123 = vmatpush1.msra.mxu0 %v929
          %1124 = vmatprep.subr.mxu0 0.0
          %1125 = vmatpush1.msra.mxu0 %v930
          %1126 = vmatprep.subr.mxu0 0.0
          %1127 = vmatpush1.msra.mxu0 %v931
          %1128 = vmatprep.subr.mxu0 0.0
          %1129 = vmatpush1.msra.mxu0 %v932
          %1130 = vmatprep.subr.mxu0 0.0
          %1131 = vmatpush1.msra.mxu0 %v933
          %1132 = vmatprep.subr.mxu0 0.0
          %1133 = vmatpush1.msra.mxu0 %v934
          %1134 = vmatprep.subr.mxu0 0.0
          %1135 = vmatpush1.msra.mxu0 %v935
          %1136 = vmatprep.subr.mxu0 0.0
          %1137 = vmatpush1.msra.mxu0 %v936
          %1138 = vmatprep.subr.mxu0 0.0
          %1139 = vmatpush1.msra.mxu0 %v937
          %1140 = vmatprep.subr.mxu0 0.0
          %1141 = vmatpush1.msra.mxu0 %v938
          %1142 = vmatprep.subr.mxu0 0.0
          %1143 = vmatpush1.msra.mxu0 %v939
          %1144 = vmatprep.subr.mxu0 0.0
          %1145 = vmatpush1.msra.mxu0 %v940
          %1146 = vmatprep.subr.mxu0 0.0
          %1147 = vmatpush1.msra.mxu0 %v941
          %1148 = vmatprep.subr.mxu0 0.0
          %1149 = vmatpush1.msra.mxu0 %v942
          %1150 = vmatprep.subr.mxu0 0.0
          %1151 = vmatpush1.msra.mxu0 %v943
          %1152 = vmatprep.subr.mxu0 0.0
          %1153 = vmatpush1.msra.mxu0 %v944
          %1154 = vmatprep.subr.mxu0 0.0
          %1155 = vmatpush1.msra.mxu0 0.0
          %1156 = vmatprep.subr.mxu0 0.0
          %1157 = vmatpush1.msra.mxu0 0.0
          %1158 = vmatprep.subr.mxu0 0.0
          %1159 = vmatpush1.msra.mxu0 0.0
          %1160 = vmatprep.subr.mxu0 0.0
          %1161 = vmatpush1.msra.mxu0 0.0
          %1162 = vmatprep.subr.mxu0 0.0
          %1163 = vmatpush1.msra.mxu0 0.0
          %1164 = vmatprep.subr.mxu0 0.0
          %1165 = vmatpush1.msra.mxu0 0.0
          %1166 = vmatprep.subr.mxu0 0.0
          %1167 = vmatpush1.msra.mxu0 0.0
          %1168 = vmatprep.subr.mxu0 0.0
          %1169 = vmatpush1.msra.mxu0 0.0
          %1170 = vmatprep.subr.mxu0 0.0
          %1171 = vmatpush1.msra.mxu0 0.0
          %1172 = vmatprep.subr.mxu0 0.0
          %1173 = vmatpush1.msra.mxu0 0.0
          %1174 = vmatprep.subr.mxu0 0.0
          %1175 = vmatpush1.msra.mxu0 0.0
          %1176 = vmatprep.subr.mxu0 0.0
          %1177 = vmatpush1.msra.mxu0 0.0
          %1178 = vmatprep.subr.mxu0 0.0
          %1179 = vmatpush1.msra.mxu0 0.0
          %1180 = vmatprep.subr.mxu0 0.0
          %1181 = vmatpush1.msra.mxu0 0.0
          %1182 = vmatprep.subr.mxu0 0.0
          %1183 = vmatpush1.msra.mxu0 0.0
          %1184 = vmatprep.subr.mxu0 0.0
          %1185 = vmatpush1.msra.mxu0 0.0
          %1186 = vmatprep.mubr.f32.mxu0 0.0
          %1187 = vmatmul.mubr.f32.gmra.mrb[0].mxu0 %v897
          %v1188 = vpop.f32.mrb[0].mxu0
          %v1189 = vadd.f32 %v1106, %v1188
          %v1190 = vpop.f32.mrb[0].mxu0
          %1191 = vmatprep.mubr.f32.mxu0 0.0
          %1192 = vmatmul.mubr.f32.gmra.mrb[0].mxu0 %v898
          %v1193 = vpop.f32.mrb[0].mxu0
          %v1194 = vadd.f32 %v1107, %v1193
          %v1195 = vpop.f32.mrb[0].mxu0
          %1196 = vmatprep.mubr.f32.mxu0 0.0
          %1197 = vmatmul.mubr.f32.gmra.mrb[0].mxu0 %v899
          %v1198 = vpop.f32.mrb[0].mxu0
          %v1199 = vadd.f32 %v1108, %v1198
          %v1200 = vpop.f32.mrb[0].mxu0
          %1201 = vmatprep.mubr.f32.mxu0 0.0
          %1202 = vmatmul.mubr.f32.gmra.mrb[0].mxu0 %v900
          %v1203 = vpop.f32.mrb[0].mxu0
          %v1204 = vadd.f32 %v1109, %v1203
          %v1205 = vpop.f32.mrb[0].mxu0
          %1206 = vmatprep.mubr.f32.mxu0 0.0
          %1207 = vmatmul.mubr.f32.gmra.mrb[0].mxu0 %v901
          %v1208 = vpop.f32.mrb[0].mxu0
          %v1209 = vadd.f32 %v1110, %v1208
          %v1210 = vpop.f32.mrb[0].mxu0
          %1211 = vmatprep.mubr.f32.mxu0 0.0
          %1212 = vmatmul.mubr.f32.gmra.mrb[0].mxu0 %v902
          %v1213 = vpop.f32.mrb[0].mxu0
          %v1214 = vadd.f32 %v1111, %v1213
          %v1215 = vpop.f32.mrb[0].mxu0
          %1216 = vmatprep.mubr.f32.mxu0 0.0
          %1217 = vmatmul.mubr.f32.gmra.mrb[0].mxu0 %v903
          %v1218 = vpop.f32.mrb[0].mxu0
          %v1219 = vadd.f32 %v1112, %v1218
          %v1220 = vpop.f32.mrb[0].mxu0
          %1221 = vmatprep.mubr.f32.mxu0 0.0
          %1222 = vmatmul.mubr.f32.gmra.mrb[0].mxu0 %v904
          %v1223 = vpop.f32.mrb[0].mxu0
          %v1224 = vadd.f32 %v1113, %v1223
          %v1225 = vpop.f32.mrb[0].mxu0
          %1226 = vmatprep.mubr.f32.mxu0 0.0
          %1227 = vmatmul.mubr.f32.gmra.mrb[0].mxu0 %v905
          %v1228 = vpop.f32.mrb[0].mxu0
          %v1229 = vadd.f32 %v1114, %v1228
          %v1230 = vpop.f32.mrb[0].mxu0
          %1231 = vmatprep.mubr.f32.mxu0 0.0
          %1232 = vmatmul.mubr.f32.gmra.mrb[0].mxu0 %v906
          %v1233 = vpop.f32.mrb[0].mxu0
          %v1234 = vadd.f32 %v1115, %v1233
          %v1235 = vpop.f32.mrb[0].mxu0
          %1236 = vmatprep.mubr.f32.mxu0 0.0
          %1237 = vmatmul.mubr.f32.gmra.mrb[0].mxu0 %v907
          %v1238 = vpop.f32.mrb[0].mxu0
          %v1239 = vadd.f32 %v1116, %v1238
          %v1240 = vpop.f32.mrb[0].mxu0
          %1241 = vmatprep.mubr.f32.mxu0 0.0
          %1242 = vmatmul.mubr.f32.gmra.mrb[0].mxu0 %v908
          %v1243 = vpop.f32.mrb[0].mxu0
          %v1244 = vadd.f32 %v1117, %v1243
          %v1245 = vpop.f32.mrb[0].mxu0
          %1246 = vmatprep.mubr.f32.mxu0 0.0
          %1247 = vmatmul.mubr.f32.gmra.mrb[0].mxu0 %v909
          %v1248 = vpop.f32.mrb[0].mxu0
          %v1249 = vadd.f32 %v1118, %v1248
          %v1250 = vpop.f32.mrb[0].mxu0
          %1251 = vmatprep.mubr.f32.mxu0 0.0
          %1252 = vmatmul.mubr.f32.gmra.mrb[0].mxu0 %v910
          %v1253 = vpop.f32.mrb[0].mxu0
          %v1254 = vadd.f32 %v1119, %v1253
          %v1255 = vpop.f32.mrb[0].mxu0
          %1256 = vmatprep.mubr.f32.mxu0 0.0
          %1257 = vmatmul.mubr.f32.gmra.mrb[0].mxu0 %v911
          %v1258 = vpop.f32.mrb[0].mxu0
          %v1259 = vadd.f32 %v1120, %v1258
          %v1260 = vpop.f32.mrb[0].mxu0
          %1261 = vmatprep.mubr.f32.mxu0 0.0
          %1262 = vmatmul.mubr.f32.gmra.mrb[0].mxu0 %v912
          %v1263 = vpop.f32.mrb[0].mxu0
          %v1264 = vadd.f32 %v1121, %v1263
          %v1265 = vpop.f32.mrb[0].mxu0
          %1266 = vdwg.mxu0
          %v1267 = vmul.f32 %v785, %v753
          %v1268 = vmul.f32 %v786, %v754
          %v1269 = vmul.f32 %v787, %v755
          %v1270 = vmul.f32 %v788, %v756
          %v1271 = vmul.f32 %v789, %v757
          %v1272 = vmul.f32 %v790, %v758
          %v1273 = vmul.f32 %v791, %v759
          %v1274 = vmul.f32 %v792, %v760
          %v1275 = vmul.f32 %v793, %v761
          %v1276 = vmul.f32 %v794, %v762
          %v1277 = vmul.f32 %v795, %v763
          %v1278 = vmul.f32 %v796, %v764
          %v1279 = vmul.f32 %v797, %v765
          %v1280 = vmul.f32 %v798, %v766
          %v1281 = vmul.f32 %v799, %v767
          %v1282 = vmul.f32 %v800, %v768
          %v1283 = vld [vmem:[%s6] sm:$0x1]
          %v1284 = vld [vmem:[%s7] sm:$0x1]
          %v1285 = vadd.f32 %v1283, %v1284
          %1287 = vset.pattern.permute.xlu0 0
          %1288 = vperm.xlu0 %1287, %v1267
          %v1289 = vpop.permute.xlu0 %1288
          %1292 = vset.pattern.permute.xlu0 0
          %1293 = vperm.xlu0 %1292, %v1268
          %v1294 = vpop.permute.xlu0 %1293
          %1297 = vset.pattern.permute.xlu0 0
          %1298 = vperm.xlu0 %1297, %v1269
          %v1299 = vpop.permute.xlu0 %1298
          %1302 = vset.pattern.permute.xlu0 0
          %1303 = vperm.xlu0 %1302, %v1270
          %v1304 = vpop.permute.xlu0 %1303
          %1307 = vset.pattern.permute.xlu0 0
          %1308 = vperm.xlu0 %1307, %v1271
          %v1309 = vpop.permute.xlu0 %1308
          %1312 = vset.pattern.permute.xlu0 0
          %1313 = vperm.xlu0 %1312, %v1272
          %v1314 = vpop.permute.xlu0 %1313
          %1317 = vset.pattern.permute.xlu0 0
          %1318 = vperm.xlu0 %1317, %v1273
          %v1319 = vpop.permute.xlu0 %1318
          %1322 = vset.pattern.permute.xlu0 0
          %1323 = vperm.xlu0 %1322, %v1274
          %v1324 = vpop.permute.xlu0 %1323
          %1327 = vset.pattern.permute.xlu0 0
          %1328 = vperm.xlu0 %1327, %v1275
          %v1329 = vpop.permute.xlu0 %1328
          %1332 = vset.pattern.permute.xlu0 0
          %1333 = vperm.xlu0 %1332, %v1276
          %v1334 = vpop.permute.xlu0 %1333
          %1337 = vset.pattern.permute.xlu0 0
          %1338 = vperm.xlu0 %1337, %v1277
          %v1339 = vpop.permute.xlu0 %1338
          %1342 = vset.pattern.permute.xlu0 0
          %1343 = vperm.xlu0 %1342, %v1278
          %v1344 = vpop.permute.xlu0 %1343
          %1347 = vset.pattern.permute.xlu0 0
          %1348 = vperm.xlu0 %1347, %v1279
          %v1349 = vpop.permute.xlu0 %1348
          %1352 = vset.pattern.permute.xlu0 0
          %1353 = vperm.xlu0 %1352, %v1280
          %v1354 = vpop.permute.xlu0 %1353
          %1357 = vset.pattern.permute.xlu0 0
          %1358 = vperm.xlu0 %1357, %v1281
          %v1359 = vpop.permute.xlu0 %1358
          %1362 = vset.pattern.permute.xlu0 0
          %1363 = vperm.xlu0 %1362, %v1282
          %v1364 = vpop.permute.xlu0 %1363
          %v1367 = vlaneseq
          %v1368 = vshrl.u32 %v1367, 7
          %v1369 = vsub.s32 0, %v1368
          %v1370 = vrot.slane %v1285, %v1369
          %v1372 = vmul.f32 %v1289, %v1370
          %v1373 = vmul.f32 %v1294, %v1370
          %v1374 = vmul.f32 %v1299, %v1370
          %v1375 = vmul.f32 %v1304, %v1370
          %v1376 = vmul.f32 %v1309, %v1370
          %v1377 = vmul.f32 %v1314, %v1370
          %v1378 = vmul.f32 %v1319, %v1370
          %v1379 = vmul.f32 %v1324, %v1370
          %v1380 = vmul.f32 %v1329, %v1370
          %v1381 = vmul.f32 %v1334, %v1370
          %v1382 = vmul.f32 %v1339, %v1370
          %v1383 = vmul.f32 %v1344, %v1370
          %v1384 = vmul.f32 %v1349, %v1370
          %v1385 = vmul.f32 %v1354, %v1370
          %v1386 = vmul.f32 %v1359, %v1370
          %v1387 = vmul.f32 %v1364, %v1370
          %v1389 = vlaneseq
          %v1390 = vshrl.u32 %v1389, 7
          %v1391 = vsub.s32 0, %v1390
          %v1392 = vrot.slane %v1284, %v1391
          %v1394 = vadd.f32 %v1372, %v1392
          %v1395 = vadd.f32 %v1373, %v1392
          %v1396 = vadd.f32 %v1374, %v1392
          %v1397 = vadd.f32 %v1375, %v1392
          %v1398 = vadd.f32 %v1376, %v1392
          %v1399 = vadd.f32 %v1377, %v1392
          %v1400 = vadd.f32 %v1378, %v1392
          %v1401 = vadd.f32 %v1379, %v1392
          %v1402 = vadd.f32 %v1380, %v1392
          %v1403 = vadd.f32 %v1381, %v1392
          %v1404 = vadd.f32 %v1382, %v1392
          %v1405 = vadd.f32 %v1383, %v1392
          %v1406 = vadd.f32 %v1384, %v1392
          %v1407 = vadd.f32 %v1385, %v1392
          %v1408 = vadd.f32 %v1386, %v1392
          %v1409 = vadd.f32 %v1387, %v1392
          %v1410 = vadd.f32 %v1189, %v1394
          %v1411 = vadd.f32 %v1194, %v1395
          %v1412 = vadd.f32 %v1199, %v1396
          %v1413 = vadd.f32 %v1204, %v1397
          %v1414 = vadd.f32 %v1209, %v1398
          %v1415 = vadd.f32 %v1214, %v1399
          %v1416 = vadd.f32 %v1219, %v1400
          %v1417 = vadd.f32 %v1224, %v1401
          %v1418 = vadd.f32 %v1229, %v1402
          %v1419 = vadd.f32 %v1234, %v1403
          %v1420 = vadd.f32 %v1239, %v1404
          %v1421 = vadd.f32 %v1244, %v1405
          %v1422 = vadd.f32 %v1249, %v1406
          %v1423 = vadd.f32 %v1254, %v1407
          %v1424 = vadd.f32 %v1259, %v1408
          %v1425 = vadd.f32 %v1264, %v1409
          %1426 = vst [vmem:[%s440] sm:$0xff] %v1410
          %1427 = vst [vmem:[%s440 + $0x8] sm:$0xff] %v1411
          %1428 = vst [vmem:[%s440 + $0x10] sm:$0xff] %v1412
          %1429 = vst [vmem:[%s440 + $0x18] sm:$0xff] %v1413
          %1430 = vst [vmem:[%s440 + $0x20] sm:$0xff] %v1414
          %1431 = vst [vmem:[%s440 + $0x28] sm:$0xff] %v1415
          %1432 = vst [vmem:[%s440 + $0x30] sm:$0xff] %v1416
          %1433 = vst [vmem:[%s440 + $0x38] sm:$0xff] %v1417
          %1434 = vst [vmem:[%s440 + $0x40] sm:$0xff] %v1418
          %1435 = vst [vmem:[%s440 + $0x48] sm:$0xff] %v1419
          %1436 = vst [vmem:[%s440 + $0x50] sm:$0xff] %v1420
          %1437 = vst [vmem:[%s440 + $0x58] sm:$0xff] %v1421
          %1438 = vst [vmem:[%s440 + $0x60] sm:$0xff] %v1422
          %1439 = vst [vmem:[%s440 + $0x68] sm:$0xff] %v1423
          %1440 = vst [vmem:[%s440 + $0x70] sm:$0xff] %v1424
          %1441 = vst [vmem:[%s440 + $0x78] sm:$0xff] %v1425
        $region76: #{tpu_custom_call.1} parent=51 // pred_fallthru
          _
        %s1442 = sand.u32 %s239, 1
        %s1443 = scalar_lea.sflag [#allocation5], %s1442
        %s1444 = sand.u32 %s239, 1
        %s1445 = smul.addr %s1444, 128
        %s1446 = scalar_lea.vmem [#allocation11], %s1445
        // Predicated region
        $region77: #{tpu_custom_call.1} parent=51 // pred_check
          %p1447 = pneg %p249
        $region78: #{tpu_custom_call.1} parent=51 // pred_check_branch
          %1449 = sbr.rel (%p1447) target = $region80
        $region79: #{tpu_custom_call.1} parent=51 // pred_region
          %s1450 = smul.u32 16, %s33
          %s1452 = ssub.s32 2048, 2048
          %1453 = vsyncadd %s1443, %s1452
          %s1454 = smul.addr %s1450, 128
          %s1455 = scalar_lea.hbm %s8, %s1454
          %s1456 = sshll.u32 %s1446, 4
          %s1457 = int_to_ptr.vmem [resolvable:$true] %s1456
          %1462 = dma.vmem_to_hbm [thread:$0]  %s1457, 2048, %s1455, %s1443, 128, 128, 8
        $region80: #{tpu_custom_call.1} parent=51 // pred_fallthru
          _
      $region52: #{tpu_custom_call.1} parent=5 // pred_fallthru
        _
      %p1463 = scmp.le.s32.totalorder 2, %s24
      // Predicated region
      $region81: #{tpu_custom_call.1} parent=5 // pred_check
        %p1464 = pneg %p1463
      $region82: #{tpu_custom_call.1} parent=5 // pred_check_branch
        %1466 = sbr.rel (%p1464) target = $region84
      $region83: #{tpu_custom_call.1} parent=5 // pred_region
        %s1467 = ssub.s32 %s24, 2
        // Predicated region
        $region85: #{tpu_custom_call.1} parent=83 // pred_check
          %p1468 = pneg %p255
        $region86: #{tpu_custom_call.1} parent=83 // pred_check_branch
          %1470 = sbr.rel (%p1468) target = $region88
        $region87: #{tpu_custom_call.1} parent=83 // pred_region
          %s1471 = sand.u32 %s240, 1
          %s1472 = scalar_lea.sflag [#allocation5], %s1471
          %s1473 = sand.u32 %s240, 1
          %s1474 = smul.addr %s1473, 128
          %s1475 = scalar_lea.vmem [#allocation11], %s1474
          %1476 = dma.done %s1472, 2048
        $region88: #{tpu_custom_call.1} parent=83 // pred_fallthru
          _
      $region84: #{tpu_custom_call.1} parent=5 // pred_fallthru
        _
    $region6: #{tpu_custom_call.1} parent=1 // loop_footer
      %s28 = sadd.s32 1, %s24
    $region7: #{tpu_custom_call.1} parent=1 // loop_footer_branch
      %23 = sbr.rel target = $region3
    $region8: #{tpu_custom_call.1} parent=1 // loop_exit
      _
    %1477 = vsyncpa [#allocation4], 1
    %s1478 = scalar_lea.sflag [#allocation4], 1
    %1479 = vsyncpa %s1478, 1
    %1480 = vsyncpa [#allocation7], 1
    %s1481 = scalar_lea.sflag [#allocation7], 1
    %1482 = vsyncpa %s1481, 1
    %1483 = vsyncpa [#allocation10], 1
    %1484 = vsyncpa [#allocation5], 1
    %s1485 = scalar_lea.sflag [#allocation5], 1
    %1486 = vsyncpa %s1485, 1

</llo_original>
